<compile_context>
chip_gen: v6e
topology: v6e:2x2x1
jax: 0.10.0
libtpu: 0.0.40
codegen_flags: <defaults>
</compile_context>

<pallas_src>
import functools

import jax
import jax.numpy as jnp
from jax.experimental import pallas as pl
from jax.experimental.pallas import tpu as pltpu


def _pick_tile(n, target, align):
    """Largest tile <= target that divides n and is a multiple of `align`;
    falls back to the full dimension (always legal)."""
    if n <= target:
        return n
    t = (target // align) * align
    while t >= align:
        if n % t == 0:
            return t
        t -= align
    return n


def _fused_vmem_limit(n, cin, cout, k, tile_n, inter_bytes):
    """Rough VMEM budget for the fused kernel (double-buffered pipeline blocks +
    resident y scratch + in-kernel temporaries)."""
    blocks = (n * cin * 4 + cin * cout * 4 + tile_n * k * 4
              + tile_n * cout * inter_bytes + 2 * cout * 4)
    scratch = n * cout * 4
    temps = 6 * tile_n * cout * 4 + tile_n * k * 4
    est = 2 * blocks + scratch + temps
    # Raise above the 16/32 MiB scoped defaults; for v7x (64 MiB physical) re-tile
    # and cap this lower if est grows.
    return int(min(100 * 2 ** 20, max(32 * 2 ** 20, est * 2)))


# ----------------------------------------------------------------------------
# Fused kernel: linear + KNN edge max-pooling + per-batch BN partial sums.
# grid = (B, N // tile_n), dimension_semantics = ("parallel", "arbitrary")
# ----------------------------------------------------------------------------
def linear_knnmax_stats_kernel(x_ref, wt_ref, knn_ref,
                               pooled_ref, psum_ref, psq_ref,
                               y_ref, *, tile_n, use_onehot):
    # x_ref:   (1, N, Cin)   resident per batch (constant over the tile axis)
    # wt_ref:  (Cin, Cout)   resident
    # knn_ref: (1, TL, K)    int32, per tile
    # pooled_ref: (1, TL, Cout)           per tile (bf16/f32)
    # psum_ref / psq_ref: (1, 1, Cout)    per-batch accumulators (lane-dense)
    # y_ref:   (N, Cout) f32 VMEM scratch (per-batch linear output)
    t = pl.program_id(1)

    @pl.when(t == 0)
    def _():
        # Fused linear for the whole batch, computed once per batch.
        # (Could be cast to bf16 for the MXU on v6e/v7x; kept f32 for accuracy.)
        y_ref[...] = jnp.dot(x_ref[0], wt_ref[...],
                             preferred_element_type=jnp.float32)
        psum_ref[...] = jnp.zeros_like(psum_ref)
        psq_ref[...] = jnp.zeros_like(psq_ref)

    y = y_ref[...]                          # (N, Cout) f32
    knn_t = knn_ref[0]                      # (TL, K) int32
    n_total, c = y.shape
    tile, num_k = knn_t.shape

    start = pl.multiple_of(t * tile_n, tile_n)
    y_center = y_ref[pl.ds(start, tile_n), :]          # (TL, Cout)

    def nbr(k):
        if use_onehot:
            # Toolchain fallback only (exact, but O(K*N^2*C) MXU work); bounded
            # to a (TL, N) intermediate per k by the point tiling.
            col = jax.lax.broadcasted_iota(jnp.int32, (tile, n_total), 1)
            onehot = (col == knn_t[:, k:k + 1]).astype(jnp.float32)
            return jnp.dot(onehot, y, preferred_element_type=jnp.float32)
        # Real gather: each output row j picks row knn_t[j, k] of the resident y.
        idx = jnp.broadcast_to(knn_t[:, k:k + 1], (tile, c))
        return jnp.take_along_axis(y, idx, axis=0, mode="promise_in_bounds")

    m = nbr(0)
    for k in range(1, num_k):               # K is small and static -> unrolled
        m = jnp.maximum(m, nbr(k))

    pooled = m - y_center                   # (TL, Cout) f32
    pooled_st = pooled.astype(pooled_ref.dtype)
    pooled_ref[0] = pooled_st

    # BN statistics from the values that will actually be normalized.
    p32 = pooled_st.astype(jnp.float32)
    psum_ref[0] = psum_ref[0] + jnp.sum(p32, axis=0, keepdims=True)
    psq_ref[0] = psq_ref[0] + jnp.sum(p32 * p32, axis=0, keepdims=True)


# ----------------------------------------------------------------------------
# Streaming BatchNorm apply: out = pooled * scale + shift   (point-major blocks)
# ----------------------------------------------------------------------------
def bn_apply_kernel(p_ref, scale_ref, shift_ref, o_ref):
    # p_ref: (1, TL, Cout)  scale/shift: (1, Cout)  o_ref: (1, TL, Cout) f32
    o_ref[0] = p_ref[0].astype(jnp.float32) * scale_ref[...] + shift_ref[...]


# ----------------------------------------------------------------------------
# Forward wrapper.
# ----------------------------------------------------------------------------
def vfr_forward(x, knn, w, gamma, beta, *, use_onehot=False, eps=1e-5,
                intermediate_dtype=jnp.bfloat16):
    B, N, Cin = x.shape
    K = knn.shape[-1]
    Cout = w.shape[0]

    x = x.astype(jnp.float32)
    knn = knn.astype(jnp.int32)
    w_t = jnp.transpose(w.astype(jnp.float32))          # (Cin, Cout): tiny, one-off

    inter_bytes = jnp.dtype(intermediate_dtype).itemsize
    tile_n = _pick_tile(N, 512, 16)                      # fused-kernel point tile
    n_t = N // tile_n

    pooled, psum, psq = pl.pallas_call(
        functools.partial(linear_knnmax_stats_kernel,
                          tile_n=tile_n, use_onehot=use_onehot),
        out_shape=(
            jax.ShapeDtypeStruct((B, N, Cout), intermediate_dtype),
            jax.ShapeDtypeStruct((B, 1, Cout), jnp.float32),
            jax.ShapeDtypeStruct((B, 1, Cout), jnp.float32),
        ),
        grid=(B, n_t),
        in_specs=[
            pl.BlockSpec((1, N, Cin), lambda b, t: (b, 0, 0)),   # resident per batch
            pl.BlockSpec((Cin, Cout), lambda b, t: (0, 0)),      # resident weight
            pl.BlockSpec((1, tile_n, K), lambda b, t: (b, t, 0)),
        ],
        out_specs=(
            pl.BlockSpec((1, tile_n, Cout), lambda b, t: (b, t, 0)),
            pl.BlockSpec((1, 1, Cout), lambda b, t: (b, 0, 0)),  # per-batch partials
            pl.BlockSpec((1, 1, Cout), lambda b, t: (b, 0, 0)),
        ),
        scratch_shapes=[pltpu.VMEM((N, Cout), jnp.float32)],
        compiler_params=pltpu.CompilerParams(
            dimension_semantics=("parallel", "arbitrary"),
            vmem_limit_bytes=_fused_vmem_limit(N, Cin, Cout, K, tile_n, inter_bytes)),
    )(x, w_t, knn)

    # --- Tiny finalize: batch statistics -> per-channel affine ---------------
    count = jnp.float32(B * N)
    mean = jnp.sum(psum, axis=0) / count                 # (1, Cout)
    var = jnp.sum(psq, axis=0) / count - mean * mean     # biased variance (BN training)
    inv = jax.lax.rsqrt(var + eps)
    scale = gamma.reshape(1, Cout) * inv
    shift = beta.reshape(1, Cout) - mean * scale

    # --- Streaming BN apply, writes the final (B, N, Cout) layout directly ---
    tile_b = _pick_tile(N, 2048, 16)
    out = pl.pallas_call(
        bn_apply_kernel,
        out_shape=jax.ShapeDtypeStruct((B, N, Cout), jnp.float32),
        grid=(B, N // tile_b),
        in_specs=[
            pl.BlockSpec((1, tile_b, Cout), lambda b, t: (b, t, 0)),
            pl.BlockSpec((1, Cout), lambda b, t: (0, 0)),
            pl.BlockSpec((1, Cout), lambda b, t: (0, 0)),
        ],
        out_specs=pl.BlockSpec((1, tile_b, Cout), lambda b, t: (b, t, 0)),
        compiler_params=pltpu.CompilerParams(
            dimension_semantics=("parallel", "parallel")),
    )(pooled, scale, shift)

    return out                                           # (B, N, Cout) f32


# ----------------------------------------------------------------------------
# Pure-JAX reference (matches the PyTorch module in training mode).
# ----------------------------------------------------------------------------
def vfr_reference(x, knn, w, gamma, beta, eps=1e-5):
    y = jnp.einsum("bnc,oc->bno", x, w)
    nbr = jax.vmap(lambda yb, kb: yb[kb])(y, knn)        # (B, N, K, C)
    pooled = jnp.max(nbr, axis=2) - y
    B, N, C = pooled.shape
    flat = pooled.reshape(B * N, C)
    mean = jnp.mean(flat, axis=0)
    var = jnp.mean((flat - mean) ** 2, axis=0)
    out = (flat - mean) / jnp.sqrt(var + eps) * gamma.reshape(-1) + beta.reshape(-1)
    return out.reshape(B, N, C)


if __name__ == "__main__":
    B, N, K = 2, 32, 8
    in_dim, out_dim = 16, 32

    key = jax.random.PRNGKey(0)
    kx, kw, kknn = jax.random.split(key, 3)

    x = jax.random.normal(kx, (B, N, in_dim), dtype=jnp.float32)
    knn = jax.random.randint(kknn, (B, N, K), 0, N, dtype=jnp.int32)

    # nn.Linear weight (no bias). BN weight init=0.0 (module default) would zero the
    # whole output, so use 1.0 to actually exercise the math; beta = 0.
    w = jax.random.normal(kw, (out_dim, in_dim), dtype=jnp.float32) / jnp.sqrt(in_dim)
    gamma = jnp.full((1, out_dim), 1.0, dtype=jnp.float32)
    beta = jnp.zeros((1, out_dim), dtype=jnp.float32)

    ref = vfr_reference(x, knn, w, gamma, beta)

    def run(use_onehot):
        fwd = jax.jit(functools.partial(vfr_forward, use_onehot=use_onehot))
        out = jax.block_until_ready(fwd(x, knn, w, gamma, beta))
        assert out.shape == (B, N, out_dim)
        err = float(jnp.max(jnp.abs(out - ref)))
        # Tolerance sized for the bf16 pooled intermediate.
        assert err < 3e-2, f"max abs err {err}"
        return out

    try:
        run(use_onehot=False)        # real in-kernel gather path
    except Exception:
        # TODO(synk): in-kernel take_along_axis gather not supported by this Mosaic
        # toolchain at these shapes; use the tile-bounded one-hot matmul fallback.
        run(use_onehot=True)

    print("KERNEL_OK")
</pallas_src>

<mosaic_0001>
module attributes {stable_mosaic.version = 11 : i64} {
  func.func @linear_knnmax_stats_kernel(%arg0: i32, %arg1: i32, %arg2: memref<1x32x16xf32, #tpu.memory_space<vmem>>, %arg3: memref<16x32xf32, #tpu.memory_space<vmem>>, %arg4: memref<1x32x8xi32, #tpu.memory_space<vmem>>, %arg5: memref<1x32x32xbf16, #tpu.memory_space<vmem>>, %arg6: memref<1x1x32xf32, #tpu.memory_space<vmem>>, %arg7: memref<1x1x32xf32, #tpu.memory_space<vmem>>, %arg8: memref<32x32xf32, #tpu.memory_space<vmem>>) attributes {dimension_semantics = [#tpu.dimension_semantics<parallel>, #tpu.dimension_semantics<arbitrary>], iteration_bounds = array<i64: 2, 1>, scalar_prefetch = 0 : i64, scratch_operands = 1 : i64, tpu.core_type = #tpu.core_type<tc>, window_params = [{transform_indices = @transform_0, window_bounds = array<i64: 1, 32, 16>}, {pipeline_mode = #tpu.pipeline_mode<synchronous>, transform_indices = @transform_1, window_bounds = array<i64: 16, 32>}, {transform_indices = @transform_2, window_bounds = array<i64: 1, 32, 8>}, {transform_indices = @transform_3, window_bounds = array<i64: 1, 32, 32>}, {transform_indices = @transform_4, window_bounds = array<i64: 1, 1, 32>}, {transform_indices = @transform_5, window_bounds = array<i64: 1, 1, 32>}]} {
    %c0_i32 = arith.constant 0 : i32
    %0 = arith.cmpi eq, %arg1, %c0_i32 : i32
    %1 = arith.extui %0 : i1 to i32
    %c0_i32_0 = arith.constant 0 : i32
    %2 = arith.cmpi ne, %1, %c0_i32_0 : i32
    scf.if %2 {
      %c0_22 = arith.constant 0 : index
      %c0_23 = arith.constant 0 : index
      %c0_24 = arith.constant 0 : index
      %88 = vector.load %arg2[%c0_22, %c0_23, %c0_24] : memref<1x32x16xf32, #tpu.memory_space<vmem>>, vector<1x32x16xf32>
      %89 = vector.shape_cast %88 : vector<1x32x16xf32> to vector<32x16xf32>
      %c0_25 = arith.constant 0 : index
      %c0_26 = arith.constant 0 : index
      %90 = vector.load %arg3[%c0_25, %c0_26] : memref<16x32xf32, #tpu.memory_space<vmem>>, vector<16x32xf32>
      %cst_27 = arith.constant dense<0.000000e+00> : vector<32x32xf32>
      %91 = tpu.matmul %89, %90, %cst_27 {dimension_numbers = #tpu.dot_dimension_numbers<[1], [0], [0], [1], [0, 0, 1, 1], [], []>} : vector<32x16xf32>, vector<16x32xf32>, vector<32x32xf32> -> vector<32x32xf32>
      %c0_28 = arith.constant 0 : index
      %c0_29 = arith.constant 0 : index
      %92 = vector.load %arg8[%c0_28, %c0_29] : memref<32x32xf32, #tpu.memory_space<vmem>>, vector<32x32xf32>
      tpu.vector_store %arg8[%c0_28, %c0_29], %91 {strides = array<i32>} : memref<32x32xf32, #tpu.memory_space<vmem>>, vector<32x32xf32>,
      %cst_30 = arith.constant 0.000000e+00 : f32
      %93 = vector.broadcast %cst_30 : f32 to vector<1x1x32xf32>
      %c0_31 = arith.constant 0 : index
      %c0_32 = arith.constant 0 : index
      %c0_33 = arith.constant 0 : index
      %94 = vector.load %arg6[%c0_31, %c0_32, %c0_33] : memref<1x1x32xf32, #tpu.memory_space<vmem>>, vector<1x1x32xf32>
      tpu.vector_store %arg6[%c0_31, %c0_32, %c0_33], %93 {strides = array<i32>} : memref<1x1x32xf32, #tpu.memory_space<vmem>>, vector<1x1x32xf32>,
      %cst_34 = arith.constant 0.000000e+00 : f32
      %95 = vector.broadcast %cst_34 : f32 to vector<1x1x32xf32>
      %c0_35 = arith.constant 0 : index
      %c0_36 = arith.constant 0 : index
      %c0_37 = arith.constant 0 : index
      %96 = vector.load %arg7[%c0_35, %c0_36, %c0_37] : memref<1x1x32xf32, #tpu.memory_space<vmem>>, vector<1x1x32xf32>
      tpu.vector_store %arg7[%c0_35, %c0_36, %c0_37], %95 {strides = array<i32>} : memref<1x1x32xf32, #tpu.memory_space<vmem>>, vector<1x1x32xf32>,
    } else {
    }
    %c0 = arith.constant 0 : index
    %c0_1 = arith.constant 0 : index
    %3 = vector.load %arg8[%c0, %c0_1] : memref<32x32xf32, #tpu.memory_space<vmem>>, vector<32x32xf32>
    %c0_2 = arith.constant 0 : index
    %c0_3 = arith.constant 0 : index
    %c0_4 = arith.constant 0 : index
    %4 = vector.load %arg4[%c0_2, %c0_3, %c0_4] : memref<1x32x8xi32, #tpu.memory_space<vmem>>, vector<1x32x8xi32>
    %5 = vector.shape_cast %4 : vector<1x32x8xi32> to vector<32x8xi32>
    %c32_i32 = arith.constant 32 : i32
    %6 = arith.muli %arg1, %c32_i32 : i32
    %7 = tpu.assume_multiple %6, 32 : i32
    %8 = arith.index_cast %7 : i32 to index
    %c0_5 = arith.constant 0 : index
    %9 = vector.load %arg8[%8, %c0_5] : memref<32x32xf32, #tpu.memory_space<vmem>>, vector<32x32xf32>
    %10 = vector.extract_strided_slice %5 {offsets = [0, 0], sizes = [32, 1], strides = [1, 1]} : vector<32x8xi32> to vector<32x1xi32>
    %11 = vector.shape_cast %10 : vector<32x1xi32> to vector<32x1xi32>
    %12 = vector.broadcast %11 : vector<32x1xi32> to vector<32x32xi32>
    %13 = vector.shape_cast %12 : vector<32x32xi32> to vector<32x32x1xi32>
    %14 = vector.shape_cast %13 : vector<32x32x1xi32> to vector<32x32xi32>
    %15 = tpu.dynamic_gather %3[%14] in [0] : vector<32x32xf32>, vector<32x32xi32> -> vector<32x32xf32>
    %16 = vector.extract_strided_slice %5 {offsets = [0, 1], sizes = [32, 1], strides = [1, 1]} : vector<32x8xi32> to vector<32x1xi32>
    %17 = vector.shape_cast %16 : vector<32x1xi32> to vector<32x1xi32>
    %18 = vector.broadcast %17 : vector<32x1xi32> to vector<32x32xi32>
    %19 = vector.shape_cast %18 : vector<32x32xi32> to vector<32x32x1xi32>
    %20 = vector.shape_cast %19 : vector<32x32x1xi32> to vector<32x32xi32>
    %21 = tpu.dynamic_gather %3[%20] in [0] : vector<32x32xf32>, vector<32x32xi32> -> vector<32x32xf32>
    %22 = arith.maximumf %15, %21 : vector<32x32xf32>
    %23 = vector.extract_strided_slice %5 {offsets = [0, 2], sizes = [32, 1], strides = [1, 1]} : vector<32x8xi32> to vector<32x1xi32>
    %24 = vector.shape_cast %23 : vector<32x1xi32> to vector<32x1xi32>
    %25 = vector.broadcast %24 : vector<32x1xi32> to vector<32x32xi32>
    %26 = vector.shape_cast %25 : vector<32x32xi32> to vector<32x32x1xi32>
    %27 = vector.shape_cast %26 : vector<32x32x1xi32> to vector<32x32xi32>
    %28 = tpu.dynamic_gather %3[%27] in [0] : vector<32x32xf32>, vector<32x32xi32> -> vector<32x32xf32>
    %29 = arith.maximumf %22, %28 : vector<32x32xf32>
    %30 = vector.extract_strided_slice %5 {offsets = [0, 3], sizes = [32, 1], strides = [1, 1]} : vector<32x8xi32> to vector<32x1xi32>
    %31 = vector.shape_cast %30 : vector<32x1xi32> to vector<32x1xi32>
    %32 = vector.broadcast %31 : vector<32x1xi32> to vector<32x32xi32>
    %33 = vector.shape_cast %32 : vector<32x32xi32> to vector<32x32x1xi32>
    %34 = vector.shape_cast %33 : vector<32x32x1xi32> to vector<32x32xi32>
    %35 = tpu.dynamic_gather %3[%34] in [0] : vector<32x32xf32>, vector<32x32xi32> -> vector<32x32xf32>
    %36 = arith.maximumf %29, %35 : vector<32x32xf32>
    %37 = vector.extract_strided_slice %5 {offsets = [0, 4], sizes = [32, 1], strides = [1, 1]} : vector<32x8xi32> to vector<32x1xi32>
    %38 = vector.shape_cast %37 : vector<32x1xi32> to vector<32x1xi32>
    %39 = vector.broadcast %38 : vector<32x1xi32> to vector<32x32xi32>
    %40 = vector.shape_cast %39 : vector<32x32xi32> to vector<32x32x1xi32>
    %41 = vector.shape_cast %40 : vector<32x32x1xi32> to vector<32x32xi32>
    %42 = tpu.dynamic_gather %3[%41] in [0] : vector<32x32xf32>, vector<32x32xi32> -> vector<32x32xf32>
    %43 = arith.maximumf %36, %42 : vector<32x32xf32>
    %44 = vector.extract_strided_slice %5 {offsets = [0, 5], sizes = [32, 1], strides = [1, 1]} : vector<32x8xi32> to vector<32x1xi32>
    %45 = vector.shape_cast %44 : vector<32x1xi32> to vector<32x1xi32>
    %46 = vector.broadcast %45 : vector<32x1xi32> to vector<32x32xi32>
    %47 = vector.shape_cast %46 : vector<32x32xi32> to vector<32x32x1xi32>
    %48 = vector.shape_cast %47 : vector<32x32x1xi32> to vector<32x32xi32>
    %49 = tpu.dynamic_gather %3[%48] in [0] : vector<32x32xf32>, vector<32x32xi32> -> vector<32x32xf32>
    %50 = arith.maximumf %43, %49 : vector<32x32xf32>
    %51 = vector.extract_strided_slice %5 {offsets = [0, 6], sizes = [32, 1], strides = [1, 1]} : vector<32x8xi32> to vector<32x1xi32>
    %52 = vector.shape_cast %51 : vector<32x1xi32> to vector<32x1xi32>
    %53 = vector.broadcast %52 : vector<32x1xi32> to vector<32x32xi32>
    %54 = vector.shape_cast %53 : vector<32x32xi32> to vector<32x32x1xi32>
    %55 = vector.shape_cast %54 : vector<32x32x1xi32> to vector<32x32xi32>
    %56 = tpu.dynamic_gather %3[%55] in [0] : vector<32x32xf32>, vector<32x32xi32> -> vector<32x32xf32>
    %57 = arith.maximumf %50, %56 : vector<32x32xf32>
    %58 = vector.extract_strided_slice %5 {offsets = [0, 7], sizes = [32, 1], strides = [1, 1]} : vector<32x8xi32> to vector<32x1xi32>
    %59 = vector.shape_cast %58 : vector<32x1xi32> to vector<32x1xi32>
    %60 = vector.broadcast %59 : vector<32x1xi32> to vector<32x32xi32>
    %61 = vector.shape_cast %60 : vector<32x32xi32> to vector<32x32x1xi32>
    %62 = vector.shape_cast %61 : vector<32x32x1xi32> to vector<32x32xi32>
    %63 = tpu.dynamic_gather %3[%62] in [0] : vector<32x32xf32>, vector<32x32xi32> -> vector<32x32xf32>
    %64 = arith.maximumf %57, %63 : vector<32x32xf32>
    %65 = arith.subf %64, %9 : vector<32x32xf32>
    %66 = arith.truncf %65 : vector<32x32xf32> to vector<32x32xbf16>
    %c0_6 = arith.constant 0 : index
    %c0_7 = arith.constant 0 : index
    %c0_8 = arith.constant 0 : index
    %67 = vector.load %arg5[%c0_6, %c0_7, %c0_8] : memref<1x32x32xbf16, #tpu.memory_space<vmem>>, vector<1x32x32xbf16>
    %68 = vector.shape_cast %67 : vector<1x32x32xbf16> to vector<32x32xbf16>
    %69 = vector.shape_cast %66 : vector<32x32xbf16> to vector<1x32x32xbf16>
    tpu.vector_store %arg5[%c0_6, %c0_7, %c0_8], %69 {strides = array<i32>} : memref<1x32x32xbf16, #tpu.memory_space<vmem>>, vector<1x32x32xbf16>,
    %70 = arith.extf %66 : vector<32x32xbf16> to vector<32x32xf32>
    %c0_9 = arith.constant 0 : index
    %c0_10 = arith.constant 0 : index
    %c0_11 = arith.constant 0 : index
    %71 = vector.load %arg6[%c0_9, %c0_10, %c0_11] : memref<1x1x32xf32, #tpu.memory_space<vmem>>, vector<1x1x32xf32>
    %72 = vector.shape_cast %71 : vector<1x1x32xf32> to vector<1x32xf32>
    %cst = arith.constant dense<0.000000e+00> : vector<32xf32>
    %73 = vector.multi_reduction <add>, %70, %cst [0] : vector<32x32xf32> to vector<32xf32>
    %74 = vector.shape_cast %73 : vector<32xf32> to vector<1x32xf32>
    %75 = arith.addf %72, %74 : vector<1x32xf32>
    %c0_12 = arith.constant 0 : index
    %c0_13 = arith.constant 0 : index
    %c0_14 = arith.constant 0 : index
    %76 = vector.load %arg6[%c0_12, %c0_13, %c0_14] : memref<1x1x32xf32, #tpu.memory_space<vmem>>, vector<1x1x32xf32>
    %77 = vector.shape_cast %76 : vector<1x1x32xf32> to vector<1x32xf32>
    %78 = vector.shape_cast %75 : vector<1x32xf32> to vector<1x1x32xf32>
    tpu.vector_store %arg6[%c0_12, %c0_13, %c0_14], %78 {strides = array<i32>} : memref<1x1x32xf32, #tpu.memory_space<vmem>>, vector<1x1x32xf32>,
    %c0_15 = arith.constant 0 : index
    %c0_16 = arith.constant 0 : index
    %c0_17 = arith.constant 0 : index
    %79 = vector.load %arg7[%c0_15, %c0_16, %c0_17] : memref<1x1x32xf32, #tpu.memory_space<vmem>>, vector<1x1x32xf32>
    %80 = vector.shape_cast %79 : vector<1x1x32xf32> to vector<1x32xf32>
    %81 = arith.mulf %70, %70 : vector<32x32xf32>
    %cst_18 = arith.constant dense<0.000000e+00> : vector<32xf32>
    %82 = vector.multi_reduction <add>, %81, %cst_18 [0] : vector<32x32xf32> to vector<32xf32>
    %83 = vector.shape_cast %82 : vector<32xf32> to vector<1x32xf32>
    %84 = arith.addf %80, %83 : vector<1x32xf32>
    %c0_19 = arith.constant 0 : index
    %c0_20 = arith.constant 0 : index
    %c0_21 = arith.constant 0 : index
    %85 = vector.load %arg7[%c0_19, %c0_20, %c0_21] : memref<1x1x32xf32, #tpu.memory_space<vmem>>, vector<1x1x32xf32>
    %86 = vector.shape_cast %85 : vector<1x1x32xf32> to vector<1x32xf32>
    %87 = vector.shape_cast %84 : vector<1x32xf32> to vector<1x1x32xf32>
    tpu.vector_store %arg7[%c0_19, %c0_20, %c0_21], %87 {strides = array<i32>} : memref<1x1x32xf32, #tpu.memory_space<vmem>>, vector<1x1x32xf32>,
    return
  }
  func.func @transform_0(%arg0: i32, %arg1: i32) -> (i32, i32, i32) {
    %c0_i32 = arith.constant 0 : i32
    %c0_i32_0 = arith.constant 0 : i32
    %c0_i32_1 = arith.constant 0 : i32
    return %arg0, %c0_i32, %c0_i32_0 : i32, i32, i32
  }
  func.func @transform_1(%arg0: i32, %arg1: i32) -> (i32, i32) {
    %c0_i32 = arith.constant 0 : i32
    %c0_i32_0 = arith.constant 0 : i32
    %c0_i32_1 = arith.constant 0 : i32
    return %c0_i32, %c0_i32_0 : i32, i32
  }
  func.func @transform_2(%arg0: i32, %arg1: i32) -> (i32, i32, i32) {
    %c0_i32 = arith.constant 0 : i32
    %c0_i32_0 = arith.constant 0 : i32
    return %arg0, %arg1, %c0_i32 : i32, i32, i32
  }
  func.func @transform_3(%arg0: i32, %arg1: i32) -> (i32, i32, i32) {
    %c0_i32 = arith.constant 0 : i32
    %c0_i32_0 = arith.constant 0 : i32
    return %arg0, %arg1, %c0_i32 : i32, i32, i32
  }
  func.func @transform_4(%arg0: i32, %arg1: i32) -> (i32, i32, i32) {
    %c0_i32 = arith.constant 0 : i32
    %c0_i32_0 = arith.constant 0 : i32
    %c0_i32_1 = arith.constant 0 : i32
    return %arg0, %c0_i32, %c0_i32_0 : i32, i32, i32
  }
  func.func @transform_5(%arg0: i32, %arg1: i32) -> (i32, i32, i32) {
    %c0_i32 = arith.constant 0 : i32
    %c0_i32_0 = arith.constant 0 : i32
    %c0_i32_1 = arith.constant 0 : i32
    return %arg0, %c0_i32, %c0_i32_0 : i32, i32, i32
  }
}

module attributes {stable_mosaic.version = 11 : i64} {
  func.func @bn_apply_kernel(%arg0: i32, %arg1: i32, %arg2: memref<1x32x32xbf16, #tpu.memory_space<vmem>>, %arg3: memref<1x32xf32, #tpu.memory_space<vmem>>, %arg4: memref<1x32xf32, #tpu.memory_space<vmem>>, %arg5: memref<1x32x32xf32, #tpu.memory_space<vmem>>) attributes {dimension_semantics = [#tpu.dimension_semantics<parallel>, #tpu.dimension_semantics<parallel>], iteration_bounds = array<i64: 2, 1>, scalar_prefetch = 0 : i64, scratch_operands = 0 : i64, tpu.core_type = #tpu.core_type<tc>, window_params = [{transform_indices = @transform_0, window_bounds = array<i64: 1, 32, 32>}, {pipeline_mode = #tpu.pipeline_mode<synchronous>, transform_indices = @transform_1, window_bounds = array<i64: 1, 32>}, {pipeline_mode = #tpu.pipeline_mode<synchronous>, transform_indices = @transform_2, window_bounds = array<i64: 1, 32>}, {transform_indices = @transform_3, window_bounds = array<i64: 1, 32, 32>}]} {
    %c0 = arith.constant 0 : index
    %c0_0 = arith.constant 0 : index
    %c0_1 = arith.constant 0 : index
    %0 = vector.load %arg2[%c0, %c0_0, %c0_1] : memref<1x32x32xbf16, #tpu.memory_space<vmem>>, vector<1x32x32xbf16>
    %1 = vector.shape_cast %0 : vector<1x32x32xbf16> to vector<32x32xbf16>
    %2 = arith.extf %1 : vector<32x32xbf16> to vector<32x32xf32>
    %c0_2 = arith.constant 0 : index
    %c0_3 = arith.constant 0 : index
    %3 = vector.load %arg3[%c0_2, %c0_3] : memref<1x32xf32, #tpu.memory_space<vmem>>, vector<1x32xf32>
    %4 = vector.broadcast %3 : vector<1x32xf32> to vector<32x32xf32>
    %5 = arith.mulf %2, %4 : vector<32x32xf32>
    %c0_4 = arith.constant 0 : index
    %c0_5 = arith.constant 0 : index
    %6 = vector.load %arg4[%c0_4, %c0_5] : memref<1x32xf32, #tpu.memory_space<vmem>>, vector<1x32xf32>
    %7 = vector.broadcast %6 : vector<1x32xf32> to vector<32x32xf32>
    %8 = arith.addf %5, %7 : vector<32x32xf32>
    %c0_6 = arith.constant 0 : index
    %c0_7 = arith.constant 0 : index
    %c0_8 = arith.constant 0 : index
    %9 = vector.load %arg5[%c0_6, %c0_7, %c0_8] : memref<1x32x32xf32, #tpu.memory_space<vmem>>, vector<1x32x32xf32>
    %10 = vector.shape_cast %9 : vector<1x32x32xf32> to vector<32x32xf32>
    %11 = vector.shape_cast %8 : vector<32x32xf32> to vector<1x32x32xf32>
    tpu.vector_store %arg5[%c0_6, %c0_7, %c0_8], %11 {strides = array<i32>} : memref<1x32x32xf32, #tpu.memory_space<vmem>>, vector<1x32x32xf32>,
    return
  }
  func.func @transform_0(%arg0: i32, %arg1: i32) -> (i32, i32, i32) {
    %c0_i32 = arith.constant 0 : i32
    %c0_i32_0 = arith.constant 0 : i32
    return %arg0, %arg1, %c0_i32 : i32, i32, i32
  }
  func.func @transform_1(%arg0: i32, %arg1: i32) -> (i32, i32) {
    %c0_i32 = arith.constant 0 : i32
    %c0_i32_0 = arith.constant 0 : i32
    %c0_i32_1 = arith.constant 0 : i32
    return %c0_i32, %c0_i32_0 : i32, i32
  }
  func.func @transform_2(%arg0: i32, %arg1: i32) -> (i32, i32) {
    %c0_i32 = arith.constant 0 : i32
    %c0_i32_0 = arith.constant 0 : i32
    %c0_i32_1 = arith.constant 0 : i32
    return %c0_i32, %c0_i32_0 : i32, i32
  }
  func.func @transform_3(%arg0: i32, %arg1: i32) -> (i32, i32, i32) {
    %c0_i32 = arith.constant 0 : i32
    %c0_i32_0 = arith.constant 0 : i32
    return %arg0, %arg1, %c0_i32 : i32, i32, i32
  }
}

module attributes {stable_mosaic.version = 11 : i64} {
  func.func @linear_knnmax_stats_kernel(%arg0: i32, %arg1: i32, %arg2: memref<1x32x16xf32, #tpu.memory_space<vmem>>, %arg3: memref<16x32xf32, #tpu.memory_space<vmem>>, %arg4: memref<1x32x8xi32, #tpu.memory_space<vmem>>, %arg5: memref<1x32x32xbf16, #tpu.memory_space<vmem>>, %arg6: memref<1x1x32xf32, #tpu.memory_space<vmem>>, %arg7: memref<1x1x32xf32, #tpu.memory_space<vmem>>, %arg8: memref<32x32xf32, #tpu.memory_space<vmem>>) attributes {dimension_semantics = [#tpu.dimension_semantics<parallel>, #tpu.dimension_semantics<arbitrary>], iteration_bounds = array<i64: 2, 1>, scalar_prefetch = 0 : i64, scratch_operands = 1 : i64, tpu.core_type = #tpu.core_type<tc>, window_params = [{transform_indices = @transform_0, window_bounds = array<i64: 1, 32, 16>}, {pipeline_mode = #tpu.pipeline_mode<synchronous>, transform_indices = @transform_1, window_bounds = array<i64: 16, 32>}, {transform_indices = @transform_2, window_bounds = array<i64: 1, 32, 8>}, {transform_indices = @transform_3, window_bounds = array<i64: 1, 32, 32>}, {transform_indices = @transform_4, window_bounds = array<i64: 1, 1, 32>}, {transform_indices = @transform_5, window_bounds = array<i64: 1, 1, 32>}]} {
    %c0_i32 = arith.constant 0 : i32
    %0 = arith.cmpi eq, %arg1, %c0_i32 : i32
    %1 = arith.extui %0 : i1 to i32
    %c0_i32_0 = arith.constant 0 : i32
    %2 = arith.cmpi ne, %1, %c0_i32_0 : i32
    scf.if %2 {
      %c0_30 = arith.constant 0 : index
      %c0_31 = arith.constant 0 : index
      %c0_32 = arith.constant 0 : index
      %96 = vector.load %arg2[%c0_30, %c0_31, %c0_32] : memref<1x32x16xf32, #tpu.memory_space<vmem>>, vector<1x32x16xf32>
      %97 = vector.shape_cast %96 : vector<1x32x16xf32> to vector<32x16xf32>
      %c0_33 = arith.constant 0 : index
      %c0_34 = arith.constant 0 : index
      %98 = vector.load %arg3[%c0_33, %c0_34] : memref<16x32xf32, #tpu.memory_space<vmem>>, vector<16x32xf32>
      %cst_35 = arith.constant dense<0.000000e+00> : vector<32x32xf32>
      %99 = tpu.matmul %97, %98, %cst_35 {dimension_numbers = #tpu.dot_dimension_numbers<[1], [0], [0], [1], [0, 0, 1, 1], [], []>} : vector<32x16xf32>, vector<16x32xf32>, vector<32x32xf32> -> vector<32x32xf32>
      %c0_36 = arith.constant 0 : index
      %c0_37 = arith.constant 0 : index
      %100 = vector.load %arg8[%c0_36, %c0_37] : memref<32x32xf32, #tpu.memory_space<vmem>>, vector<32x32xf32>
      tpu.vector_store %arg8[%c0_36, %c0_37], %99 {strides = array<i32>} : memref<32x32xf32, #tpu.memory_space<vmem>>, vector<32x32xf32>,
      %cst_38 = arith.constant 0.000000e+00 : f32
      %101 = vector.broadcast %cst_38 : f32 to vector<1x1x32xf32>
      %c0_39 = arith.constant 0 : index
      %c0_40 = arith.constant 0 : index
      %c0_41 = arith.constant 0 : index
      %102 = vector.load %arg6[%c0_39, %c0_40, %c0_41] : memref<1x1x32xf32, #tpu.memory_space<vmem>>, vector<1x1x32xf32>
      tpu.vector_store %arg6[%c0_39, %c0_40, %c0_41], %101 {strides = array<i32>} : memref<1x1x32xf32, #tpu.memory_space<vmem>>, vector<1x1x32xf32>,
      %cst_42 = arith.constant 0.000000e+00 : f32
      %103 = vector.broadcast %cst_42 : f32 to vector<1x1x32xf32>
      %c0_43 = arith.constant 0 : index
      %c0_44 = arith.constant 0 : index
      %c0_45 = arith.constant 0 : index
      %104 = vector.load %arg7[%c0_43, %c0_44, %c0_45] : memref<1x1x32xf32, #tpu.memory_space<vmem>>, vector<1x1x32xf32>
      tpu.vector_store %arg7[%c0_43, %c0_44, %c0_45], %103 {strides = array<i32>} : memref<1x1x32xf32, #tpu.memory_space<vmem>>, vector<1x1x32xf32>,
    } else {
    }
    %c0 = arith.constant 0 : index
    %c0_1 = arith.constant 0 : index
    %3 = vector.load %arg8[%c0, %c0_1] : memref<32x32xf32, #tpu.memory_space<vmem>>, vector<32x32xf32>
    %c0_2 = arith.constant 0 : index
    %c0_3 = arith.constant 0 : index
    %c0_4 = arith.constant 0 : index
    %4 = vector.load %arg4[%c0_2, %c0_3, %c0_4] : memref<1x32x8xi32, #tpu.memory_space<vmem>>, vector<1x32x8xi32>
    %5 = vector.shape_cast %4 : vector<1x32x8xi32> to vector<32x8xi32>
    %c32_i32 = arith.constant 32 : i32
    %6 = arith.muli %arg1, %c32_i32 : i32
    %7 = tpu.assume_multiple %6, 32 : i32
    %8 = arith.index_cast %7 : i32 to index
    %c0_5 = arith.constant 0 : index
    %9 = vector.load %arg8[%8, %c0_5] : memref<32x32xf32, #tpu.memory_space<vmem>>, vector<32x32xf32>
    %10 = tpu.iota {dimensions = array<i32: 1>} : vector<32x32xi32>
    %11 = vector.extract_strided_slice %5 {offsets = [0, 0], sizes = [32, 1], strides = [1, 1]} : vector<32x8xi32> to vector<32x1xi32>
    %12 = vector.broadcast %11 : vector<32x1xi32> to vector<32x32xi32>
    %13 = arith.cmpi eq, %10, %12 : vector<32x32xi32>
    %14 = arith.extui %13 : vector<32x32xi1> to vector<32x32xi32>
    %15 = arith.sitofp %14 : vector<32x32xi32> to vector<32x32xf32>
    %cst = arith.constant dense<0.000000e+00> : vector<32x32xf32>
    %16 = tpu.matmul %15, %3, %cst {dimension_numbers = #tpu.dot_dimension_numbers<[1], [0], [0], [1], [0, 0, 1, 1], [], []>} : vector<32x32xf32>, vector<32x32xf32>, vector<32x32xf32> -> vector<32x32xf32>
    %17 = tpu.iota {dimensions = array<i32: 1>} : vector<32x32xi32>
    %18 = vector.extract_strided_slice %5 {offsets = [0, 1], sizes = [32, 1], strides = [1, 1]} : vector<32x8xi32> to vector<32x1xi32>
    %19 = vector.broadcast %18 : vector<32x1xi32> to vector<32x32xi32>
    %20 = arith.cmpi eq, %17, %19 : vector<32x32xi32>
    %21 = arith.extui %20 : vector<32x32xi1> to vector<32x32xi32>
    %22 = arith.sitofp %21 : vector<32x32xi32> to vector<32x32xf32>
    %cst_6 = arith.constant dense<0.000000e+00> : vector<32x32xf32>
    %23 = tpu.matmul %22, %3, %cst_6 {dimension_numbers = #tpu.dot_dimension_numbers<[1], [0], [0], [1], [0, 0, 1, 1], [], []>} : vector<32x32xf32>, vector<32x32xf32>, vector<32x32xf32> -> vector<32x32xf32>
    %24 = arith.maximumf %16, %23 : vector<32x32xf32>
    %25 = tpu.iota {dimensions = array<i32: 1>} : vector<32x32xi32>
    %26 = vector.extract_strided_slice %5 {offsets = [0, 2], sizes = [32, 1], strides = [1, 1]} : vector<32x8xi32> to vector<32x1xi32>
    %27 = vector.broadcast %26 : vector<32x1xi32> to vector<32x32xi32>
    %28 = arith.cmpi eq, %25, %27 : vector<32x32xi32>
    %29 = arith.extui %28 : vector<32x32xi1> to vector<32x32xi32>
    %30 = arith.sitofp %29 : vector<32x32xi32> to vector<32x32xf32>
    %cst_7 = arith.constant dense<0.000000e+00> : vector<32x32xf32>
    %31 = tpu.matmul %30, %3, %cst_7 {dimension_numbers = #tpu.dot_dimension_numbers<[1], [0], [0], [1], [0, 0, 1, 1], [], []>} : vector<32x32xf32>, vector<32x32xf32>, vector<32x32xf32> -> vector<32x32xf32>
    %32 = arith.maximumf %24, %31 : vector<32x32xf32>
    %33 = tpu.iota {dimensions = array<i32: 1>} : vector<32x32xi32>
    %34 = vector.extract_strided_slice %5 {offsets = [0, 3], sizes = [32, 1], strides = [1, 1]} : vector<32x8xi32> to vector<32x1xi32>
    %35 = vector.broadcast %34 : vector<32x1xi32> to vector<32x32xi32>
    %36 = arith.cmpi eq, %33, %35 : vector<32x32xi32>
    %37 = arith.extui %36 : vector<32x32xi1> to vector<32x32xi32>
    %38 = arith.sitofp %37 : vector<32x32xi32> to vector<32x32xf32>
    %cst_8 = arith.constant dense<0.000000e+00> : vector<32x32xf32>
    %39 = tpu.matmul %38, %3, %cst_8 {dimension_numbers = #tpu.dot_dimension_numbers<[1], [0], [0], [1], [0, 0, 1, 1], [], []>} : vector<32x32xf32>, vector<32x32xf32>, vector<32x32xf32> -> vector<32x32xf32>
    %40 = arith.maximumf %32, %39 : vector<32x32xf32>
    %41 = tpu.iota {dimensions = array<i32: 1>} : vector<32x32xi32>
    %42 = vector.extract_strided_slice %5 {offsets = [0, 4], sizes = [32, 1], strides = [1, 1]} : vector<32x8xi32> to vector<32x1xi32>
    %43 = vector.broadcast %42 : vector<32x1xi32> to vector<32x32xi32>
    %44 = arith.cmpi eq, %41, %43 : vector<32x32xi32>
    %45 = arith.extui %44 : vector<32x32xi1> to vector<32x32xi32>
    %46 = arith.sitofp %45 : vector<32x32xi32> to vector<32x32xf32>
    %cst_9 = arith.constant dense<0.000000e+00> : vector<32x32xf32>
    %47 = tpu.matmul %46, %3, %cst_9 {dimension_numbers = #tpu.dot_dimension_numbers<[1], [0], [0], [1], [0, 0, 1, 1], [], []>} : vector<32x32xf32>, vector<32x32xf32>, vector<32x32xf32> -> vector<32x32xf32>
    %48 = arith.maximumf %40, %47 : vector<32x32xf32>
    %49 = tpu.iota {dimensions = array<i32: 1>} : vector<32x32xi32>
    %50 = vector.extract_strided_slice %5 {offsets = [0, 5], sizes = [32, 1], strides = [1, 1]} : vector<32x8xi32> to vector<32x1xi32>
    %51 = vector.broadcast %50 : vector<32x1xi32> to vector<32x32xi32>
    %52 = arith.cmpi eq, %49, %51 : vector<32x32xi32>
    %53 = arith.extui %52 : vector<32x32xi1> to vector<32x32xi32>
    %54 = arith.sitofp %53 : vector<32x32xi32> to vector<32x32xf32>
    %cst_10 = arith.constant dense<0.000000e+00> : vector<32x32xf32>
    %55 = tpu.matmul %54, %3, %cst_10 {dimension_numbers = #tpu.dot_dimension_numbers<[1], [0], [0], [1], [0, 0, 1, 1], [], []>} : vector<32x32xf32>, vector<32x32xf32>, vector<32x32xf32> -> vector<32x32xf32>
    %56 = arith.maximumf %48, %55 : vector<32x32xf32>
    %57 = tpu.iota {dimensions = array<i32: 1>} : vector<32x32xi32>
    %58 = vector.extract_strided_slice %5 {offsets = [0, 6], sizes = [32, 1], strides = [1, 1]} : vector<32x8xi32> to vector<32x1xi32>
    %59 = vector.broadcast %58 : vector<32x1xi32> to vector<32x32xi32>
    %60 = arith.cmpi eq, %57, %59 : vector<32x32xi32>
    %61 = arith.extui %60 : vector<32x32xi1> to vector<32x32xi32>
    %62 = arith.sitofp %61 : vector<32x32xi32> to vector<32x32xf32>
    %cst_11 = arith.constant dense<0.000000e+00> : vector<32x32xf32>
    %63 = tpu.matmul %62, %3, %cst_11 {dimension_numbers = #tpu.dot_dimension_numbers<[1], [0], [0], [1], [0, 0, 1, 1], [], []>} : vector<32x32xf32>, vector<32x32xf32>, vector<32x32xf32> -> vector<32x32xf32>
    %64 = arith.maximumf %56, %63 : vector<32x32xf32>
    %65 = tpu.iota {dimensions = array<i32: 1>} : vector<32x32xi32>
    %66 = vector.extract_strided_slice %5 {offsets = [0, 7], sizes = [32, 1], strides = [1, 1]} : vector<32x8xi32> to vector<32x1xi32>
    %67 = vector.broadcast %66 : vector<32x1xi32> to vector<32x32xi32>
    %68 = arith.cmpi eq, %65, %67 : vector<32x32xi32>
    %69 = arith.extui %68 : vector<32x32xi1> to vector<32x32xi32>
    %70 = arith.sitofp %69 : vector<32x32xi32> to vector<32x32xf32>
    %cst_12 = arith.constant dense<0.000000e+00> : vector<32x32xf32>
    %71 = tpu.matmul %70, %3, %cst_12 {dimension_numbers = #tpu.dot_dimension_numbers<[1], [0], [0], [1], [0, 0, 1, 1], [], []>} : vector<32x32xf32>, vector<32x32xf32>, vector<32x32xf32> -> vector<32x32xf32>
    %72 = arith.maximumf %64, %71 : vector<32x32xf32>
    %73 = arith.subf %72, %9 : vector<32x32xf32>
    %74 = arith.truncf %73 : vector<32x32xf32> to vector<32x32xbf16>
    %c0_13 = arith.constant 0 : index
    %c0_14 = arith.constant 0 : index
    %c0_15 = arith.constant 0 : index
    %75 = vector.load %arg5[%c0_13, %c0_14, %c0_15] : memref<1x32x32xbf16, #tpu.memory_space<vmem>>, vector<1x32x32xbf16>
    %76 = vector.shape_cast %75 : vector<1x32x32xbf16> to vector<32x32xbf16>
    %77 = vector.shape_cast %74 : vector<32x32xbf16> to vector<1x32x32xbf16>
    tpu.vector_store %arg5[%c0_13, %c0_14, %c0_15], %77 {strides = array<i32>} : memref<1x32x32xbf16, #tpu.memory_space<vmem>>, vector<1x32x32xbf16>,
    %78 = arith.extf %74 : vector<32x32xbf16> to vector<32x32xf32>
    %c0_16 = arith.constant 0 : index
    %c0_17 = arith.constant 0 : index
    %c0_18 = arith.constant 0 : index
    %79 = vector.load %arg6[%c0_16, %c0_17, %c0_18] : memref<1x1x32xf32, #tpu.memory_space<vmem>>, vector<1x1x32xf32>
    %80 = vector.shape_cast %79 : vector<1x1x32xf32> to vector<1x32xf32>
    %cst_19 = arith.constant dense<0.000000e+00> : vector<32xf32>
    %81 = vector.multi_reduction <add>, %78, %cst_19 [0] : vector<32x32xf32> to vector<32xf32>
    %82 = vector.shape_cast %81 : vector<32xf32> to vector<1x32xf32>
    %83 = arith.addf %80, %82 : vector<1x32xf32>
    %c0_20 = arith.constant 0 : index
    %c0_21 = arith.constant 0 : index
    %c0_22 = arith.constant 0 : index
    %84 = vector.load %arg6[%c0_20, %c0_21, %c0_22] : memref<1x1x32xf32, #tpu.memory_space<vmem>>, vector<1x1x32xf32>
    %85 = vector.shape_cast %84 : vector<1x1x32xf32> to vector<1x32xf32>
    %86 = vector.shape_cast %83 : vector<1x32xf32> to vector<1x1x32xf32>
    tpu.vector_store %arg6[%c0_20, %c0_21, %c0_22], %86 {strides = array<i32>} : memref<1x1x32xf32, #tpu.memory_space<vmem>>, vector<1x1x32xf32>,
    %c0_23 = arith.constant 0 : index
    %c0_24 = arith.constant 0 : index
    %c0_25 = arith.constant 0 : index
    %87 = vector.load %arg7[%c0_23, %c0_24, %c0_25] : memref<1x1x32xf32, #tpu.memory_space<vmem>>, vector<1x1x32xf32>
    %88 = vector.shape_cast %87 : vector<1x1x32xf32> to vector<1x32xf32>
    %89 = arith.mulf %78, %78 : vector<32x32xf32>
    %cst_26 = arith.constant dense<0.000000e+00> : vector<32xf32>
    %90 = vector.multi_reduction <add>, %89, %cst_26 [0] : vector<32x32xf32> to vector<32xf32>
    %91 = vector.shape_cast %90 : vector<32xf32> to vector<1x32xf32>
    %92 = arith.addf %88, %91 : vector<1x32xf32>
    %c0_27 = arith.constant 0 : index
    %c0_28 = arith.constant 0 : index
    %c0_29 = arith.constant 0 : index
    %93 = vector.load %arg7[%c0_27, %c0_28, %c0_29] : memref<1x1x32xf32, #tpu.memory_space<vmem>>, vector<1x1x32xf32>
    %94 = vector.shape_cast %93 : vector<1x1x32xf32> to vector<1x32xf32>
    %95 = vector.shape_cast %92 : vector<1x32xf32> to vector<1x1x32xf32>
    tpu.vector_store %arg7[%c0_27, %c0_28, %c0_29], %95 {strides = array<i32>} : memref<1x1x32xf32, #tpu.memory_space<vmem>>, vector<1x1x32xf32>,
    return
  }
  func.func @transform_0(%arg0: i32, %arg1: i32) -> (i32, i32, i32) {
    %c0_i32 = arith.constant 0 : i32
    %c0_i32_0 = arith.constant 0 : i32
    %c0_i32_1 = arith.constant 0 : i32
    return %arg0, %c0_i32, %c0_i32_0 : i32, i32, i32
  }
  func.func @transform_1(%arg0: i32, %arg1: i32) -> (i32, i32) {
    %c0_i32 = arith.constant 0 : i32
    %c0_i32_0 = arith.constant 0 : i32
    %c0_i32_1 = arith.constant 0 : i32
    return %c0_i32, %c0_i32_0 : i32, i32
  }
  func.func @transform_2(%arg0: i32, %arg1: i32) -> (i32, i32, i32) {
    %c0_i32 = arith.constant 0 : i32
    %c0_i32_0 = arith.constant 0 : i32
    return %arg0, %arg1, %c0_i32 : i32, i32, i32
  }
  func.func @transform_3(%arg0: i32, %arg1: i32) -> (i32, i32, i32) {
    %c0_i32 = arith.constant 0 : i32
    %c0_i32_0 = arith.constant 0 : i32
    return %arg0, %arg1, %c0_i32 : i32, i32, i32
  }
  func.func @transform_4(%arg0: i32, %arg1: i32) -> (i32, i32, i32) {
    %c0_i32 = arith.constant 0 : i32
    %c0_i32_0 = arith.constant 0 : i32
    %c0_i32_1 = arith.constant 0 : i32
    return %arg0, %c0_i32, %c0_i32_0 : i32, i32, i32
  }
  func.func @transform_5(%arg0: i32, %arg1: i32) -> (i32, i32, i32) {
    %c0_i32 = arith.constant 0 : i32
    %c0_i32_0 = arith.constant 0 : i32
    %c0_i32_1 = arith.constant 0 : i32
    return %arg0, %c0_i32, %c0_i32_0 : i32, i32, i32
  }
}

module attributes {stable_mosaic.version = 11 : i64} {
  func.func @bn_apply_kernel(%arg0: i32, %arg1: i32, %arg2: memref<1x32x32xbf16, #tpu.memory_space<vmem>>, %arg3: memref<1x32xf32, #tpu.memory_space<vmem>>, %arg4: memref<1x32xf32, #tpu.memory_space<vmem>>, %arg5: memref<1x32x32xf32, #tpu.memory_space<vmem>>) attributes {dimension_semantics = [#tpu.dimension_semantics<parallel>, #tpu.dimension_semantics<parallel>], iteration_bounds = array<i64: 2, 1>, scalar_prefetch = 0 : i64, scratch_operands = 0 : i64, tpu.core_type = #tpu.core_type<tc>, window_params = [{transform_indices = @transform_0, window_bounds = array<i64: 1, 32, 32>}, {pipeline_mode = #tpu.pipeline_mode<synchronous>, transform_indices = @transform_1, window_bounds = array<i64: 1, 32>}, {pipeline_mode = #tpu.pipeline_mode<synchronous>, transform_indices = @transform_2, window_bounds = array<i64: 1, 32>}, {transform_indices = @transform_3, window_bounds = array<i64: 1, 32, 32>}]} {
    %c0 = arith.constant 0 : index
    %c0_0 = arith.constant 0 : index
    %c0_1 = arith.constant 0 : index
    %0 = vector.load %arg2[%c0, %c0_0, %c0_1] : memref<1x32x32xbf16, #tpu.memory_space<vmem>>, vector<1x32x32xbf16>
    %1 = vector.shape_cast %0 : vector<1x32x32xbf16> to vector<32x32xbf16>
    %2 = arith.extf %1 : vector<32x32xbf16> to vector<32x32xf32>
    %c0_2 = arith.constant 0 : index
    %c0_3 = arith.constant 0 : index
    %3 = vector.load %arg3[%c0_2, %c0_3] : memref<1x32xf32, #tpu.memory_space<vmem>>, vector<1x32xf32>
    %4 = vector.broadcast %3 : vector<1x32xf32> to vector<32x32xf32>
    %5 = arith.mulf %2, %4 : vector<32x32xf32>
    %c0_4 = arith.constant 0 : index
    %c0_5 = arith.constant 0 : index
    %6 = vector.load %arg4[%c0_4, %c0_5] : memref<1x32xf32, #tpu.memory_space<vmem>>, vector<1x32xf32>
    %7 = vector.broadcast %6 : vector<1x32xf32> to vector<32x32xf32>
    %8 = arith.addf %5, %7 : vector<32x32xf32>
    %c0_6 = arith.constant 0 : index
    %c0_7 = arith.constant 0 : index
    %c0_8 = arith.constant 0 : index
    %9 = vector.load %arg5[%c0_6, %c0_7, %c0_8] : memref<1x32x32xf32, #tpu.memory_space<vmem>>, vector<1x32x32xf32>
    %10 = vector.shape_cast %9 : vector<1x32x32xf32> to vector<32x32xf32>
    %11 = vector.shape_cast %8 : vector<32x32xf32> to vector<1x32x32xf32>
    tpu.vector_store %arg5[%c0_6, %c0_7, %c0_8], %11 {strides = array<i32>} : memref<1x32x32xf32, #tpu.memory_space<vmem>>, vector<1x32x32xf32>,
    return
  }
  func.func @transform_0(%arg0: i32, %arg1: i32) -> (i32, i32, i32) {
    %c0_i32 = arith.constant 0 : i32
    %c0_i32_0 = arith.constant 0 : i32
    return %arg0, %arg1, %c0_i32 : i32, i32, i32
  }
  func.func @transform_1(%arg0: i32, %arg1: i32) -> (i32, i32) {
    %c0_i32 = arith.constant 0 : i32
    %c0_i32_0 = arith.constant 0 : i32
    %c0_i32_1 = arith.constant 0 : i32
    return %c0_i32, %c0_i32_0 : i32, i32
  }
  func.func @transform_2(%arg0: i32, %arg1: i32) -> (i32, i32) {
    %c0_i32 = arith.constant 0 : i32
    %c0_i32_0 = arith.constant 0 : i32
    %c0_i32_1 = arith.constant 0 : i32
    return %c0_i32, %c0_i32_0 : i32, i32
  }
  func.func @transform_3(%arg0: i32, %arg1: i32) -> (i32, i32, i32) {
    %c0_i32 = arith.constant 0 : i32
    %c0_i32_0 = arith.constant 0 : i32
    return %arg0, %arg1, %c0_i32 : i32, i32, i32
  }
}

</mosaic_0001>

<llo_original>
// kernel: vfr_forward.3
$region0: #{vfr_forward.3}
  #allocation0 [shape = 'u32[]', space=smem, size = 0x4, offset = 0x4, fixed_abs, tag = 'smem constant byte address 0x4 - core index']
  #allocation1 [shape = 'u32[144,128]{1,0:T(1,128)}', space=vmem, size = 0x12000, scoped, tag = 'internal scratch']
  %s0 = inlined_call_operand.vmem [shape: bf16[2,32,32], index: 0, kind: input, shape index: {}]
  %s1 = inlined_call_operand.vmem [shape: f32[1,32], index: 1, kind: input, shape index: {}]
  %s2 = inlined_call_operand.vmem [shape: f32[1,32], index: 2, kind: input, shape index: {}]
  %s3 = inlined_call_operand.hbm [shape: f32[2,32,32], index: 3, kind: output, shape index: {}]
  %s4 = sld [smem:[#allocation0]]
  $region45: #{vfr_forward.3} parent=0
    _
  %s6 = ssub.s32 1, %s4
  %s7 = scalar_select 0, %s6, %s4
  $region1: #{vfr_forward.3} parent=0
    #allocation2 [shape = 'u8[32768]{0}', space=vmem, size = 0x8000, scoped, tag = 'output window, operand 0']
    #allocation3 [shape = 's32[2]{0}', space=sflag, size = 0x8, scoped, tag = 'scoped memory for vfr_forward.3']
    %8 = vsyncpa [#allocation3], 0
    %s9 = scalar_lea.sflag [#allocation3], 1
    %10 = vsyncpa %s9, 0
    loop: start=0, step=1, limit=4
    $region2: #{vfr_forward.3} parent=1 // loop_pre_header
      _
    $region3: #{vfr_forward.3} parent=1 // loop_header
      %s12 = sphi 0, %s16
      %p13 = scmp.ge.s32.totalorder %s12, 4
      %s19 = sphi 0, %s31
      %s20 = sphi 0, %s27
      %s21 = sphi 0, %s19
      %s22 = sphi 0, %s20
      %s23 = sphi 0, %s21
      %s24 = sphi 0, %s22
      %s36 = sphi 0, %s38
      %s39 = sphi 0, %s36
      %s40 = sphi 0, %s39
      %s56 = sphi 0, %s40
      %s60 = sphi 0, %s60
      %s62 = sphi 0, %s60
      %s63 = sphi 0, %s62
      %s77 = sphi 0, %s63
      %s81 = sphi 0, %s81
      %s83 = sphi 0, %s81
      %s84 = sphi 0, %s83
      %s98 = sphi 0, %s84
      %s106 = sphi 0, %s108
      %s109 = sphi 0, %s106
      %s110 = sphi 0, %s109
      %s126 = sphi 0, %s110
    $region4: #{vfr_forward.3} parent=1 // loop_header_branch
      %15 = sbr.rel (%p13) target = $region8
    $region5: #{vfr_forward.3} parent=1 // loop_body
      %s17 = ssub.s32 %s12, 1
      %s18 = ssub.s32 %s12, 2
      %s25 = sadd.s32 1, %s20
      %p26 = scmp.ge.s32.totalorder %s25, 1
      %s27 = scalar_select %p26, 0, %s25
      %s28 = sadd.s32 1, %s19
      %s29 = scalar_select %p26, %s28, %s19
      %p30 = scmp.ge.s32.totalorder %s29, 2
      %s31 = scalar_select %p30, 0, %s29
      %s32 = ssub.s32 %s19, %s31
      %s33 = ssub.s32 %s20, %s27
      %s34 = sor.u32 %s32, %s33
      %p35 = scmp.eq.s32.totalorder %s34, 0
      %s37 = sadd.s32 %s36, 1
      %s38 = scalar_select %p35, %s36, %s37
      %p41 = pneg %p35
      %p42 = scmp.eq.s32.totalorder %s12, 1
      %p43 = por %p41, %p42
      %p44 = scmp.ne.s32.totalorder %s36, %s39
      %p45 = scmp.eq.s32.totalorder %s12, 0
      %p46 = por %p44, %p45
      %p47 = scmp.ne.s32.totalorder %s36, %s39
      %p48 = scmp.eq.s32.totalorder %s17, 1
      %p49 = por %p47, %p48
      %p50 = scmp.ne.s32.totalorder %s39, %s40
      %p51 = scmp.eq.s32.totalorder %s17, 0
      %p52 = por %p50, %p51
      %p53 = scmp.ne.s32.totalorder %s39, %s40
      %p54 = scmp.eq.s32.totalorder %s18, 1
      %p55 = por %p53, %p54
      %p57 = scmp.ne.s32.totalorder %s40, %s56
      %p58 = scmp.eq.s32.totalorder %s18, 0
      %p59 = por %p57, %p58
      %s61 = sadd.s32 %s60, 1
      %p64 = scmp.eq.s32.totalorder %s12, 1
      %p65 = scmp.ne.s32.totalorder %s60, %s62
      %p66 = scmp.eq.s32.totalorder %s12, 0
      %p67 = por %p65, %p66
      %p68 = scmp.ne.s32.totalorder %s60, %s62
      %p69 = scmp.eq.s32.totalorder %s17, 1
      %p70 = por %p68, %p69
      %p71 = scmp.ne.s32.totalorder %s62, %s63
      %p72 = scmp.eq.s32.totalorder %s17, 0
      %p73 = por %p71, %p72
      %p74 = scmp.ne.s32.totalorder %s62, %s63
      %p75 = scmp.eq.s32.totalorder %s18, 1
      %p76 = por %p74, %p75
      %p78 = scmp.ne.s32.totalorder %s63, %s77
      %p79 = scmp.eq.s32.totalorder %s18, 0
      %p80 = por %p78, %p79
      %s82 = sadd.s32 %s81, 1
      %p85 = scmp.eq.s32.totalorder %s12, 1
      %p86 = scmp.ne.s32.totalorder %s81, %s83
      %p87 = scmp.eq.s32.totalorder %s12, 0
      %p88 = por %p86, %p87
      %p89 = scmp.ne.s32.totalorder %s81, %s83
      %p90 = scmp.eq.s32.totalorder %s17, 1
      %p91 = por %p89, %p90
      %p92 = scmp.ne.s32.totalorder %s83, %s84
      %p93 = scmp.eq.s32.totalorder %s17, 0
      %p94 = por %p92, %p93
      %p95 = scmp.ne.s32.totalorder %s83, %s84
      %p96 = scmp.eq.s32.totalorder %s18, 1
      %p97 = por %p95, %p96
      %p99 = scmp.ne.s32.totalorder %s84, %s98
      %p100 = scmp.eq.s32.totalorder %s18, 0
      %p101 = por %p99, %p100
      %s102 = ssub.s32 %s19, %s31
      %s103 = ssub.s32 %s20, %s27
      %s104 = sor.u32 %s102, %s103
      %p105 = scmp.eq.s32.totalorder %s104, 0
      %s107 = sadd.s32 %s106, 1
      %s108 = scalar_select %p105, %s106, %s107
      %p111 = pneg %p105
      %p112 = scmp.eq.s32.totalorder %s12, 1
      %p113 = por %p111, %p112
      %p114 = scmp.ne.s32.totalorder %s106, %s109
      %p115 = scmp.eq.s32.totalorder %s12, 0
      %p116 = por %p114, %p115
      %p117 = scmp.ne.s32.totalorder %s106, %s109
      %p118 = scmp.eq.s32.totalorder %s17, 1
      %p119 = por %p117, %p118
      %p120 = scmp.ne.s32.totalorder %s109, %s110
      %p121 = scmp.eq.s32.totalorder %s17, 0
      %p122 = por %p120, %p121
      %p123 = scmp.ne.s32.totalorder %s109, %s110
      %p124 = scmp.eq.s32.totalorder %s18, 1
      %p125 = por %p123, %p124
      %p127 = scmp.ne.s32.totalorder %s110, %s126
      %p128 = scmp.eq.s32.totalorder %s18, 0
      %p129 = por %p127, %p128
      %p130 = scmp.le.s32.totalorder 1, %s12
      %p131 = scmp.lt.s32.totalorder %s12, 3
      %p132 = pnand %p130, %p131
      %p133 = pneg %p132
      // Predicated region
      $region9: #{vfr_forward.3} parent=5 // pred_check
        _
      $region10: #{vfr_forward.3} parent=5 // pred_check_branch
        %135 = sbr.rel (%p132) target = $region12
      $region11: #{vfr_forward.3} parent=5 // pred_region
        %s136 = ssub.s32 %s12, 1
        // Predicated region
        $region13: #{vfr_forward.3} parent=11 // pred_check
          %p137 = pneg %p73
        $region14: #{vfr_forward.3} parent=11 // pred_check_branch
          %139 = sbr.rel (%p137) target = $region16
        $region15: #{vfr_forward.3} parent=11 // pred_region
          _
        $region16: #{vfr_forward.3} parent=11 // pred_fallthru
          _
        // Predicated region
        $region17: #{vfr_forward.3} parent=11 // pred_check
          %p140 = pneg %p94
        $region18: #{vfr_forward.3} parent=11 // pred_check_branch
          %142 = sbr.rel (%p140) target = $region20
        $region19: #{vfr_forward.3} parent=11 // pred_region
          _
        $region20: #{vfr_forward.3} parent=11 // pred_fallthru
          _
      $region12: #{vfr_forward.3} parent=5 // pred_fallthru
        _
      %p143 = scmp.lt.s32.totalorder %s12, 2
      // Predicated region
      $region21: #{vfr_forward.3} parent=5 // pred_check
        %p144 = pneg %p143
      $region22: #{vfr_forward.3} parent=5 // pred_check_branch
        %146 = sbr.rel (%p144) target = $region24
      $region23: #{vfr_forward.3} parent=5 // pred_region
        // Predicated region
        $region25: #{vfr_forward.3} parent=23 // pred_check
          %p147 = pneg %p46
        $region26: #{vfr_forward.3} parent=23 // pred_check_branch
          %149 = sbr.rel (%p147) target = $region28
        $region27: #{vfr_forward.3} parent=23 // pred_region
          %s150 = smul.u32 4, %s20
          %p151 = scmp.lt.s32.totalorder %s19, 1
          %s152 = scalar_select %p151, %s19, 1
          %p153 = scmp.lt.s32.totalorder %s150, 3
          %s154 = scalar_select %p153, %s150, 3
          %s155 = smul.addr %s152, 4
          %s156 = sadd.s32 %s154, %s155
          %s157 = smul.addr %s156, 4
          %s158 = scalar_lea.vmem %s0, %s157
          %s159 = smul.u32 4, %s20
        $region28: #{vfr_forward.3} parent=23 // pred_fallthru
          _
      $region24: #{vfr_forward.3} parent=5 // pred_fallthru
        _
      %p160 = scmp.le.s32.totalorder 1, %s12
      %p161 = scmp.lt.s32.totalorder %s12, 3
      %p162 = pnand %p160, %p161
      %p163 = pneg %p162
      // Predicated region
      $region29: #{vfr_forward.3} parent=5 // pred_check
        _
      $region30: #{vfr_forward.3} parent=5 // pred_check_branch
        %165 = sbr.rel (%p162) target = $region32
      $region31: #{vfr_forward.3} parent=5 // pred_region
        %s166 = ssub.s32 %s12, 1
        %s167 = smul.u32 4, %s22
        %p168 = scmp.lt.s32.totalorder %s21, 1
        %s169 = scalar_select %p168, %s21, 1
        %p170 = scmp.lt.s32.totalorder %s167, 3
        %s171 = scalar_select %p170, %s167, 3
        %s172 = smul.addr %s169, 4
        %s173 = sadd.s32 %s171, %s172
        %s174 = smul.addr %s173, 4
        %s175 = scalar_lea.vmem %s0, %s174
        %p176 = pneg %p52
        %p177 = pneg %p49
        %p178 = pneg %p73
        %p179 = pneg %p70
        %p180 = pneg %p94
        %p181 = pneg %p91
        %p182 = pneg %p122
        %p183 = pneg %p119
        %s184 = sand.u32 %s109, 1
        %s185 = scalar_lea.sflag [#allocation3], %s184
        %s186 = sand.u32 %s109, 1
        %s187 = smul.addr %s186, 32
        %s188 = scalar_lea.vmem [#allocation2], %s187
        %s189 = smul.u32 4, %s22
        %p190 = scmp.lt.s32.totalorder %s21, 1
        %s191 = scalar_select %p190, %s21, 1
        %p192 = scmp.lt.s32.totalorder %s189, 3
        %s193 = scalar_select %p192, %s189, 3
        %s194 = smul.addr %s191, 4
        %s195 = sadd.s32 %s193, %s194
        %s196 = smul.addr %s195, 4
        %s197 = scalar_lea.vmem %s0, %s196
        %s198 = smul.u32 4, %s22
        %s199 = smul.u32 4, %s22
        %v200 = vld [vmem:[%s197] sm:$0xf]
        %v201 = vld [vmem:[%s197 + $0x4] sm:$0xf]
        %v202 = vld [vmem:[%s197 + $0x8] sm:$0xf]
        %v203 = vld [vmem:[%s197 + $0xc] sm:$0xf]
        %v204 = vunpack.c.l.bf16 %v200
        %v205 = vunpack.c.l.bf16 %v201
        %v206 = vunpack.c.l.bf16 %v202
        %v207 = vunpack.c.l.bf16 %v203
        %v208 = vld [vmem:[%s1] sm:$0x1]
        %v210 = vlaneseq
        %v211 = vshrl.u32 %v210, 7
        %v212 = vsub.s32 0, %v211
        %v213 = vrot.slane %v208, %v212
        %v215 = vmul.f32 %v204, %v213
        %v216 = vmul.f32 %v205, %v213
        %v217 = vmul.f32 %v206, %v213
        %v218 = vmul.f32 %v207, %v213
        %v219 = vld [vmem:[%s2] sm:$0x1]
        %v221 = vlaneseq
        %v222 = vshrl.u32 %v221, 7
        %v223 = vsub.s32 0, %v222
        %v224 = vrot.slane %v219, %v223
        %v226 = vadd.f32 %v215, %v224
        %v227 = vadd.f32 %v216, %v224
        %v228 = vadd.f32 %v217, %v224
        %v229 = vadd.f32 %v218, %v224
        %vm230 = vcmask 261120
        %231 = vst.msk [vmem:[%s188] sm:$0xff] %vm230, %v226
        %232 = vst.msk [vmem:[%s188 + $0x8] sm:$0xff] %vm230, %v227
        %233 = vst.msk [vmem:[%s188 + $0x10] sm:$0xff] %vm230, %v228
        %234 = vst.msk [vmem:[%s188 + $0x18] sm:$0xff] %vm230, %v229
        %s235 = sand.u32 %s109, 1
        %s236 = scalar_lea.sflag [#allocation3], %s235
        %s237 = sand.u32 %s109, 1
        %s238 = smul.addr %s237, 32
        %s239 = scalar_lea.vmem [#allocation2], %s238
        // Predicated region
        $region33: #{vfr_forward.3} parent=31 // pred_check
          %p240 = pneg %p119
        $region34: #{vfr_forward.3} parent=31 // pred_check_branch
          %242 = sbr.rel (%p240) target = $region36
        $region35: #{vfr_forward.3} parent=31 // pred_region
          %s243 = smul.u32 4, %s22
          %s245 = ssub.s32 512, 512
          %246 = vsyncadd %s236, %s245
          %s247 = smul.addr %s21, 4
          %s248 = sadd.s32 %s243, %s247
          %s249 = smul.addr %s248, 128
          %s250 = scalar_lea.hbm %s3, %s249
          %s251 = sshll.u32 %s239, 4
          %s252 = int_to_ptr.vmem [resolvable:$true] %s251
          %257 = dma.vmem_to_hbm [thread:$0]  %s252, 512, %s250, %s236, 128, 128, 8
        $region36: #{vfr_forward.3} parent=31 // pred_fallthru
          _
      $region32: #{vfr_forward.3} parent=5 // pred_fallthru
        _
      %p258 = scmp.le.s32.totalorder 2, %s12
      // Predicated region
      $region37: #{vfr_forward.3} parent=5 // pred_check
        %p259 = pneg %p258
      $region38: #{vfr_forward.3} parent=5 // pred_check_branch
        %261 = sbr.rel (%p259) target = $region40
      $region39: #{vfr_forward.3} parent=5 // pred_region
        %s262 = ssub.s32 %s12, 2
        // Predicated region
        $region41: #{vfr_forward.3} parent=39 // pred_check
          %p263 = pneg %p125
        $region42: #{vfr_forward.3} parent=39 // pred_check_branch
          %265 = sbr.rel (%p263) target = $region44
        $region43: #{vfr_forward.3} parent=39 // pred_region
          %s266 = sand.u32 %s110, 1
          %s267 = scalar_lea.sflag [#allocation3], %s266
          %s268 = sand.u32 %s110, 1
          %s269 = smul.addr %s268, 32
          %s270 = scalar_lea.vmem [#allocation2], %s269
          %271 = dma.done %s267, 512
        $region44: #{vfr_forward.3} parent=39 // pred_fallthru
          _
      $region40: #{vfr_forward.3} parent=5 // pred_fallthru
        _
    $region6: #{vfr_forward.3} parent=1 // loop_footer
      %s16 = sadd.s32 1, %s12
    $region7: #{vfr_forward.3} parent=1 // loop_footer_branch
      %11 = sbr.rel target = $region3
    $region8: #{vfr_forward.3} parent=1 // loop_exit
      _
    %272 = vsyncpa [#allocation3], 1
    %s273 = scalar_lea.sflag [#allocation3], 1
    %274 = vsyncpa %s273, 1

// kernel: vfr_forward.3
$region0: #{vfr_forward.3}
  #allocation0 [shape = 'u32[]', space=smem, size = 0x4, offset = 0x4, fixed_abs, tag = 'smem constant byte address 0x4 - core index']
  #allocation1 [shape = 'u32[144,128]{1,0:T(1,128)}', space=vmem, size = 0x12000, scoped, tag = 'internal scratch']
  %s0 = inlined_call_operand.vmem [shape: bf16[2,32,32], index: 0, kind: input, shape index: {}]
  %s1 = inlined_call_operand.vmem [shape: f32[1,32], index: 1, kind: input, shape index: {}]
  %s2 = inlined_call_operand.vmem [shape: f32[1,32], index: 2, kind: input, shape index: {}]
  %s3 = inlined_call_operand.hbm [shape: f32[2,32,32], index: 3, kind: output, shape index: {}]
  %s4 = sld [smem:[#allocation0]]
  $region45: #{vfr_forward.3} parent=0
    _
  %s6 = ssub.s32 1, %s4
  %s7 = scalar_select 0, %s6, %s4
  $region1: #{vfr_forward.3} parent=0
    #allocation2 [shape = 'u8[32768]{0}', space=vmem, size = 0x8000, scoped, tag = 'output window, operand 0']
    #allocation3 [shape = 's32[2]{0}', space=sflag, size = 0x8, scoped, tag = 'scoped memory for vfr_forward.3']
    %8 = vsyncpa [#allocation3], 0
    %s9 = scalar_lea.sflag [#allocation3], 1
    %10 = vsyncpa %s9, 0
    loop: start=0, step=1, limit=4
    $region2: #{vfr_forward.3} parent=1 // loop_pre_header
      _
    $region3: #{vfr_forward.3} parent=1 // loop_header
      %s12 = sphi 0, %s16
      %p13 = scmp.ge.s32.totalorder %s12, 4
      %s19 = sphi 0, %s31
      %s20 = sphi 0, %s27
      %s21 = sphi 0, %s19
      %s22 = sphi 0, %s20
      %s23 = sphi 0, %s21
      %s24 = sphi 0, %s22
      %s36 = sphi 0, %s38
      %s39 = sphi 0, %s36
      %s40 = sphi 0, %s39
      %s56 = sphi 0, %s40
      %s60 = sphi 0, %s60
      %s62 = sphi 0, %s60
      %s63 = sphi 0, %s62
      %s77 = sphi 0, %s63
      %s81 = sphi 0, %s81
      %s83 = sphi 0, %s81
      %s84 = sphi 0, %s83
      %s98 = sphi 0, %s84
      %s106 = sphi 0, %s108
      %s109 = sphi 0, %s106
      %s110 = sphi 0, %s109
      %s126 = sphi 0, %s110
    $region4: #{vfr_forward.3} parent=1 // loop_header_branch
      %15 = sbr.rel (%p13) target = $region8
    $region5: #{vfr_forward.3} parent=1 // loop_body
      %s17 = ssub.s32 %s12, 1
      %s18 = ssub.s32 %s12, 2
      %s25 = sadd.s32 1, %s20
      %p26 = scmp.ge.s32.totalorder %s25, 1
      %s27 = scalar_select %p26, 0, %s25
      %s28 = sadd.s32 1, %s19
      %s29 = scalar_select %p26, %s28, %s19
      %p30 = scmp.ge.s32.totalorder %s29, 2
      %s31 = scalar_select %p30, 0, %s29
      %s32 = ssub.s32 %s19, %s31
      %s33 = ssub.s32 %s20, %s27
      %s34 = sor.u32 %s32, %s33
      %p35 = scmp.eq.s32.totalorder %s34, 0
      %s37 = sadd.s32 %s36, 1
      %s38 = scalar_select %p35, %s36, %s37
      %p41 = pneg %p35
      %p42 = scmp.eq.s32.totalorder %s12, 1
      %p43 = por %p41, %p42
      %p44 = scmp.ne.s32.totalorder %s36, %s39
      %p45 = scmp.eq.s32.totalorder %s12, 0
      %p46 = por %p44, %p45
      %p47 = scmp.ne.s32.totalorder %s36, %s39
      %p48 = scmp.eq.s32.totalorder %s17, 1
      %p49 = por %p47, %p48
      %p50 = scmp.ne.s32.totalorder %s39, %s40
      %p51 = scmp.eq.s32.totalorder %s17, 0
      %p52 = por %p50, %p51
      %p53 = scmp.ne.s32.totalorder %s39, %s40
      %p54 = scmp.eq.s32.totalorder %s18, 1
      %p55 = por %p53, %p54
      %p57 = scmp.ne.s32.totalorder %s40, %s56
      %p58 = scmp.eq.s32.totalorder %s18, 0
      %p59 = por %p57, %p58
      %s61 = sadd.s32 %s60, 1
      %p64 = scmp.eq.s32.totalorder %s12, 1
      %p65 = scmp.ne.s32.totalorder %s60, %s62
      %p66 = scmp.eq.s32.totalorder %s12, 0
      %p67 = por %p65, %p66
      %p68 = scmp.ne.s32.totalorder %s60, %s62
      %p69 = scmp.eq.s32.totalorder %s17, 1
      %p70 = por %p68, %p69
      %p71 = scmp.ne.s32.totalorder %s62, %s63
      %p72 = scmp.eq.s32.totalorder %s17, 0
      %p73 = por %p71, %p72
      %p74 = scmp.ne.s32.totalorder %s62, %s63
      %p75 = scmp.eq.s32.totalorder %s18, 1
      %p76 = por %p74, %p75
      %p78 = scmp.ne.s32.totalorder %s63, %s77
      %p79 = scmp.eq.s32.totalorder %s18, 0
      %p80 = por %p78, %p79
      %s82 = sadd.s32 %s81, 1
      %p85 = scmp.eq.s32.totalorder %s12, 1
      %p86 = scmp.ne.s32.totalorder %s81, %s83
      %p87 = scmp.eq.s32.totalorder %s12, 0
      %p88 = por %p86, %p87
      %p89 = scmp.ne.s32.totalorder %s81, %s83
      %p90 = scmp.eq.s32.totalorder %s17, 1
      %p91 = por %p89, %p90
      %p92 = scmp.ne.s32.totalorder %s83, %s84
      %p93 = scmp.eq.s32.totalorder %s17, 0
      %p94 = por %p92, %p93
      %p95 = scmp.ne.s32.totalorder %s83, %s84
      %p96 = scmp.eq.s32.totalorder %s18, 1
      %p97 = por %p95, %p96
      %p99 = scmp.ne.s32.totalorder %s84, %s98
      %p100 = scmp.eq.s32.totalorder %s18, 0
      %p101 = por %p99, %p100
      %s102 = ssub.s32 %s19, %s31
      %s103 = ssub.s32 %s20, %s27
      %s104 = sor.u32 %s102, %s103
      %p105 = scmp.eq.s32.totalorder %s104, 0
      %s107 = sadd.s32 %s106, 1
      %s108 = scalar_select %p105, %s106, %s107
      %p111 = pneg %p105
      %p112 = scmp.eq.s32.totalorder %s12, 1
      %p113 = por %p111, %p112
      %p114 = scmp.ne.s32.totalorder %s106, %s109
      %p115 = scmp.eq.s32.totalorder %s12, 0
      %p116 = por %p114, %p115
      %p117 = scmp.ne.s32.totalorder %s106, %s109
      %p118 = scmp.eq.s32.totalorder %s17, 1
      %p119 = por %p117, %p118
      %p120 = scmp.ne.s32.totalorder %s109, %s110
      %p121 = scmp.eq.s32.totalorder %s17, 0
      %p122 = por %p120, %p121
      %p123 = scmp.ne.s32.totalorder %s109, %s110
      %p124 = scmp.eq.s32.totalorder %s18, 1
      %p125 = por %p123, %p124
      %p127 = scmp.ne.s32.totalorder %s110, %s126
      %p128 = scmp.eq.s32.totalorder %s18, 0
      %p129 = por %p127, %p128
      %p130 = scmp.le.s32.totalorder 1, %s12
      %p131 = scmp.lt.s32.totalorder %s12, 3
      %p132 = pnand %p130, %p131
      %p133 = pneg %p132
      // Predicated region
      $region9: #{vfr_forward.3} parent=5 // pred_check
        _
      $region10: #{vfr_forward.3} parent=5 // pred_check_branch
        %135 = sbr.rel (%p132) target = $region12
      $region11: #{vfr_forward.3} parent=5 // pred_region
        %s136 = ssub.s32 %s12, 1
        // Predicated region
        $region13: #{vfr_forward.3} parent=11 // pred_check
          %p137 = pneg %p73
        $region14: #{vfr_forward.3} parent=11 // pred_check_branch
          %139 = sbr.rel (%p137) target = $region16
        $region15: #{vfr_forward.3} parent=11 // pred_region
          _
        $region16: #{vfr_forward.3} parent=11 // pred_fallthru
          _
        // Predicated region
        $region17: #{vfr_forward.3} parent=11 // pred_check
          %p140 = pneg %p94
        $region18: #{vfr_forward.3} parent=11 // pred_check_branch
          %142 = sbr.rel (%p140) target = $region20
        $region19: #{vfr_forward.3} parent=11 // pred_region
          _
        $region20: #{vfr_forward.3} parent=11 // pred_fallthru
          _
      $region12: #{vfr_forward.3} parent=5 // pred_fallthru
        _
      %p143 = scmp.lt.s32.totalorder %s12, 2
      // Predicated region
      $region21: #{vfr_forward.3} parent=5 // pred_check
        %p144 = pneg %p143
      $region22: #{vfr_forward.3} parent=5 // pred_check_branch
        %146 = sbr.rel (%p144) target = $region24
      $region23: #{vfr_forward.3} parent=5 // pred_region
        // Predicated region
        $region25: #{vfr_forward.3} parent=23 // pred_check
          %p147 = pneg %p46
        $region26: #{vfr_forward.3} parent=23 // pred_check_branch
          %149 = sbr.rel (%p147) target = $region28
        $region27: #{vfr_forward.3} parent=23 // pred_region
          %s150 = smul.u32 4, %s20
          %p151 = scmp.lt.s32.totalorder %s19, 1
          %s152 = scalar_select %p151, %s19, 1
          %p153 = scmp.lt.s32.totalorder %s150, 3
          %s154 = scalar_select %p153, %s150, 3
          %s155 = smul.addr %s152, 4
          %s156 = sadd.s32 %s154, %s155
          %s157 = smul.addr %s156, 4
          %s158 = scalar_lea.vmem %s0, %s157
          %s159 = smul.u32 4, %s20
        $region28: #{vfr_forward.3} parent=23 // pred_fallthru
          _
      $region24: #{vfr_forward.3} parent=5 // pred_fallthru
        _
      %p160 = scmp.le.s32.totalorder 1, %s12
      %p161 = scmp.lt.s32.totalorder %s12, 3
      %p162 = pnand %p160, %p161
      %p163 = pneg %p162
      // Predicated region
      $region29: #{vfr_forward.3} parent=5 // pred_check
        _
      $region30: #{vfr_forward.3} parent=5 // pred_check_branch
        %165 = sbr.rel (%p162) target = $region32
      $region31: #{vfr_forward.3} parent=5 // pred_region
        %s166 = ssub.s32 %s12, 1
        %s167 = smul.u32 4, %s22
        %p168 = scmp.lt.s32.totalorder %s21, 1
        %s169 = scalar_select %p168, %s21, 1
        %p170 = scmp.lt.s32.totalorder %s167, 3
        %s171 = scalar_select %p170, %s167, 3
        %s172 = smul.addr %s169, 4
        %s173 = sadd.s32 %s171, %s172
        %s174 = smul.addr %s173, 4
        %s175 = scalar_lea.vmem %s0, %s174
        %p176 = pneg %p52
        %p177 = pneg %p49
        %p178 = pneg %p73
        %p179 = pneg %p70
        %p180 = pneg %p94
        %p181 = pneg %p91
        %p182 = pneg %p122
        %p183 = pneg %p119
        %s184 = sand.u32 %s109, 1
        %s185 = scalar_lea.sflag [#allocation3], %s184
        %s186 = sand.u32 %s109, 1
        %s187 = smul.addr %s186, 32
        %s188 = scalar_lea.vmem [#allocation2], %s187
        %s189 = smul.u32 4, %s22
        %p190 = scmp.lt.s32.totalorder %s21, 1
        %s191 = scalar_select %p190, %s21, 1
        %p192 = scmp.lt.s32.totalorder %s189, 3
        %s193 = scalar_select %p192, %s189, 3
        %s194 = smul.addr %s191, 4
        %s195 = sadd.s32 %s193, %s194
        %s196 = smul.addr %s195, 4
        %s197 = scalar_lea.vmem %s0, %s196
        %s198 = smul.u32 4, %s22
        %s199 = smul.u32 4, %s22
        %v200 = vld [vmem:[%s197] sm:$0xf]
        %v201 = vld [vmem:[%s197 + $0x4] sm:$0xf]
        %v202 = vld [vmem:[%s197 + $0x8] sm:$0xf]
        %v203 = vld [vmem:[%s197 + $0xc] sm:$0xf]
        %v204 = vunpack.c.l.bf16 %v200
        %v205 = vunpack.c.l.bf16 %v201
        %v206 = vunpack.c.l.bf16 %v202
        %v207 = vunpack.c.l.bf16 %v203
        %v208 = vld [vmem:[%s1] sm:$0x1]
        %v210 = vlaneseq
        %v211 = vshrl.u32 %v210, 7
        %v212 = vsub.s32 0, %v211
        %v213 = vrot.slane %v208, %v212
        %v215 = vmul.f32 %v204, %v213
        %v216 = vmul.f32 %v205, %v213
        %v217 = vmul.f32 %v206, %v213
        %v218 = vmul.f32 %v207, %v213
        %v219 = vld [vmem:[%s2] sm:$0x1]
        %v221 = vlaneseq
        %v222 = vshrl.u32 %v221, 7
        %v223 = vsub.s32 0, %v222
        %v224 = vrot.slane %v219, %v223
        %v226 = vadd.f32 %v215, %v224
        %v227 = vadd.f32 %v216, %v224
        %v228 = vadd.f32 %v217, %v224
        %v229 = vadd.f32 %v218, %v224
        %vm230 = vcmask 261120
        %231 = vst.msk [vmem:[%s188] sm:$0xff] %vm230, %v226
        %232 = vst.msk [vmem:[%s188 + $0x8] sm:$0xff] %vm230, %v227
        %233 = vst.msk [vmem:[%s188 + $0x10] sm:$0xff] %vm230, %v228
        %234 = vst.msk [vmem:[%s188 + $0x18] sm:$0xff] %vm230, %v229
        %s235 = sand.u32 %s109, 1
        %s236 = scalar_lea.sflag [#allocation3], %s235
        %s237 = sand.u32 %s109, 1
        %s238 = smul.addr %s237, 32
        %s239 = scalar_lea.vmem [#allocation2], %s238
        // Predicated region
        $region33: #{vfr_forward.3} parent=31 // pred_check
          %p240 = pneg %p119
        $region34: #{vfr_forward.3} parent=31 // pred_check_branch
          %242 = sbr.rel (%p240) target = $region36
        $region35: #{vfr_forward.3} parent=31 // pred_region
          %s243 = smul.u32 4, %s22
          %s245 = ssub.s32 512, 512
          %246 = vsyncadd %s236, %s245
          %s247 = smul.addr %s21, 4
          %s248 = sadd.s32 %s243, %s247
          %s249 = smul.addr %s248, 128
          %s250 = scalar_lea.hbm %s3, %s249
          %s251 = sshll.u32 %s239, 4
          %s252 = int_to_ptr.vmem [resolvable:$true] %s251
          %257 = dma.vmem_to_hbm [thread:$0]  %s252, 512, %s250, %s236, 128, 128, 8
        $region36: #{vfr_forward.3} parent=31 // pred_fallthru
          _
      $region32: #{vfr_forward.3} parent=5 // pred_fallthru
        _
      %p258 = scmp.le.s32.totalorder 2, %s12
      // Predicated region
      $region37: #{vfr_forward.3} parent=5 // pred_check
        %p259 = pneg %p258
      $region38: #{vfr_forward.3} parent=5 // pred_check_branch
        %261 = sbr.rel (%p259) target = $region40
      $region39: #{vfr_forward.3} parent=5 // pred_region
        %s262 = ssub.s32 %s12, 2
        // Predicated region
        $region41: #{vfr_forward.3} parent=39 // pred_check
          %p263 = pneg %p125
        $region42: #{vfr_forward.3} parent=39 // pred_check_branch
          %265 = sbr.rel (%p263) target = $region44
        $region43: #{vfr_forward.3} parent=39 // pred_region
          %s266 = sand.u32 %s110, 1
          %s267 = scalar_lea.sflag [#allocation3], %s266
          %s268 = sand.u32 %s110, 1
          %s269 = smul.addr %s268, 32
          %s270 = scalar_lea.vmem [#allocation2], %s269
          %271 = dma.done %s267, 512
        $region44: #{vfr_forward.3} parent=39 // pred_fallthru
          _
      $region40: #{vfr_forward.3} parent=5 // pred_fallthru
        _
    $region6: #{vfr_forward.3} parent=1 // loop_footer
      %s16 = sadd.s32 1, %s12
    $region7: #{vfr_forward.3} parent=1 // loop_footer_branch
      %11 = sbr.rel target = $region3
    $region8: #{vfr_forward.3} parent=1 // loop_exit
      _
    %272 = vsyncpa [#allocation3], 1
    %s273 = scalar_lea.sflag [#allocation3], 1
    %274 = vsyncpa %s273, 1

// kernel: vfr_forward.2
$region0: #{vfr_forward.2}
  #allocation0 [shape = 'u32[]', space=smem, size = 0x4, offset = 0x4, fixed_abs, tag = 'smem constant byte address 0x4 - core index']
  #allocation1 [shape = 'u32[144,128]{1,0:T(1,128)}', space=vmem, size = 0x12000, scoped, tag = 'internal scratch']
  #allocation2 [shape = 'f32[32,32]{1,0:T(8,128)}', space=vmem, size = 0x4000, scoped, tag = 'scratch operand']
  %s0 = inlined_call_operand.vmem [shape: f32[2,32,16], index: 0, kind: input, shape index: {}]
  %s1 = inlined_call_operand.vmem [shape: f32[16,32], index: 1, kind: input, shape index: {}]
  %s2 = inlined_call_operand.vmem [shape: s32[2,32,8], index: 2, kind: input, shape index: {}]
  %s3 = inlined_call_operand.vmem [shape: bf16[2,32,32], index: 3, kind: output, shape index: {0}]
  %s4 = inlined_call_operand.vmem [shape: f32[2,1,32], index: 4, kind: output, shape index: {1}]
  %s5 = inlined_call_operand.vmem [shape: f32[2,1,32], index: 5, kind: output, shape index: {2}]
  %6 = xla_tuple %s3, %s4, %s5
  %s7 = sld [smem:[#allocation0]]
  $region65: #{vfr_forward.2} parent=0
    _
  %s9 = ssub.s32 1, %s7
  %s10 = scalar_select 0, %s9, %s7
  loop: start=0, step=1, limit=4
  $region2: #{vfr_forward.2} parent=0 // loop_pre_header
    _
  $region3: #{vfr_forward.2} parent=0 // loop_header
    %s12 = sphi 0, %s16
    %p13 = scmp.ge.s32.totalorder %s12, 4
    %s19 = sphi 0, %s31
    %s20 = sphi 0, %s27
    %s21 = sphi 0, %s19
    %s22 = sphi 0, %s20
    %s23 = sphi 0, %s21
    %s24 = sphi 0, %s22
    %s34 = sphi 0, %s36
    %s37 = sphi 0, %s34
    %s38 = sphi 0, %s37
    %s54 = sphi 0, %s38
    %s58 = sphi 0, %s58
    %s60 = sphi 0, %s58
    %s61 = sphi 0, %s60
    %s75 = sphi 0, %s61
    %s83 = sphi 0, %s85
    %s86 = sphi 0, %s83
    %s87 = sphi 0, %s86
    %s103 = sphi 0, %s87
    %s111 = sphi 0, %s113
    %s114 = sphi 0, %s111
    %s115 = sphi 0, %s114
    %s131 = sphi 0, %s115
    %s137 = sphi 0, %s139
    %s140 = sphi 0, %s137
    %s141 = sphi 0, %s140
    %s157 = sphi 0, %s141
    %s163 = sphi 0, %s165
    %s166 = sphi 0, %s163
    %s167 = sphi 0, %s166
    %s183 = sphi 0, %s167
  $region4: #{vfr_forward.2} parent=0 // loop_header_branch
    %15 = sbr.rel (%p13) target = $region8
  $region5: #{vfr_forward.2} parent=0 // loop_body
    %s17 = ssub.s32 %s12, 1
    %s18 = ssub.s32 %s12, 2
    %s25 = sadd.s32 1, %s20
    %p26 = scmp.ge.s32.totalorder %s25, 1
    %s27 = scalar_select %p26, 0, %s25
    %s28 = sadd.s32 1, %s19
    %s29 = scalar_select %p26, %s28, %s19
    %p30 = scmp.ge.s32.totalorder %s29, 2
    %s31 = scalar_select %p30, 0, %s29
    %s32 = ssub.s32 %s19, %s31
    %p33 = scmp.eq.s32.totalorder %s32, 0
    %s35 = sadd.s32 %s34, 1
    %s36 = scalar_select %p33, %s34, %s35
    %p39 = pneg %p33
    %p40 = scmp.eq.s32.totalorder %s12, 1
    %p41 = por %p39, %p40
    %p42 = scmp.ne.s32.totalorder %s34, %s37
    %p43 = scmp.eq.s32.totalorder %s12, 0
    %p44 = por %p42, %p43
    %p45 = scmp.ne.s32.totalorder %s34, %s37
    %p46 = scmp.eq.s32.totalorder %s17, 1
    %p47 = por %p45, %p46
    %p48 = scmp.ne.s32.totalorder %s37, %s38
    %p49 = scmp.eq.s32.totalorder %s17, 0
    %p50 = por %p48, %p49
    %p51 = scmp.ne.s32.totalorder %s37, %s38
    %p52 = scmp.eq.s32.totalorder %s18, 1
    %p53 = por %p51, %p52
    %p55 = scmp.ne.s32.totalorder %s38, %s54
    %p56 = scmp.eq.s32.totalorder %s18, 0
    %p57 = por %p55, %p56
    %s59 = sadd.s32 %s58, 1
    %p62 = scmp.eq.s32.totalorder %s12, 1
    %p63 = scmp.ne.s32.totalorder %s58, %s60
    %p64 = scmp.eq.s32.totalorder %s12, 0
    %p65 = por %p63, %p64
    %p66 = scmp.ne.s32.totalorder %s58, %s60
    %p67 = scmp.eq.s32.totalorder %s17, 1
    %p68 = por %p66, %p67
    %p69 = scmp.ne.s32.totalorder %s60, %s61
    %p70 = scmp.eq.s32.totalorder %s17, 0
    %p71 = por %p69, %p70
    %p72 = scmp.ne.s32.totalorder %s60, %s61
    %p73 = scmp.eq.s32.totalorder %s18, 1
    %p74 = por %p72, %p73
    %p76 = scmp.ne.s32.totalorder %s61, %s75
    %p77 = scmp.eq.s32.totalorder %s18, 0
    %p78 = por %p76, %p77
    %s79 = ssub.s32 %s19, %s31
    %s80 = ssub.s32 %s20, %s27
    %s81 = sor.u32 %s79, %s80
    %p82 = scmp.eq.s32.totalorder %s81, 0
    %s84 = sadd.s32 %s83, 1
    %s85 = scalar_select %p82, %s83, %s84
    %p88 = pneg %p82
    %p89 = scmp.eq.s32.totalorder %s12, 1
    %p90 = por %p88, %p89
    %p91 = scmp.ne.s32.totalorder %s83, %s86
    %p92 = scmp.eq.s32.totalorder %s12, 0
    %p93 = por %p91, %p92
    %p94 = scmp.ne.s32.totalorder %s83, %s86
    %p95 = scmp.eq.s32.totalorder %s17, 1
    %p96 = por %p94, %p95
    %p97 = scmp.ne.s32.totalorder %s86, %s87
    %p98 = scmp.eq.s32.totalorder %s17, 0
    %p99 = por %p97, %p98
    %p100 = scmp.ne.s32.totalorder %s86, %s87
    %p101 = scmp.eq.s32.totalorder %s18, 1
    %p102 = por %p100, %p101
    %p104 = scmp.ne.s32.totalorder %s87, %s103
    %p105 = scmp.eq.s32.totalorder %s18, 0
    %p106 = por %p104, %p105
    %s107 = ssub.s32 %s19, %s31
    %s108 = ssub.s32 %s20, %s27
    %s109 = sor.u32 %s107, %s108
    %p110 = scmp.eq.s32.totalorder %s109, 0
    %s112 = sadd.s32 %s111, 1
    %s113 = scalar_select %p110, %s111, %s112
    %p116 = pneg %p110
    %p117 = scmp.eq.s32.totalorder %s12, 1
    %p118 = por %p116, %p117
    %p119 = scmp.ne.s32.totalorder %s111, %s114
    %p120 = scmp.eq.s32.totalorder %s12, 0
    %p121 = por %p119, %p120
    %p122 = scmp.ne.s32.totalorder %s111, %s114
    %p123 = scmp.eq.s32.totalorder %s17, 1
    %p124 = por %p122, %p123
    %p125 = scmp.ne.s32.totalorder %s114, %s115
    %p126 = scmp.eq.s32.totalorder %s17, 0
    %p127 = por %p125, %p126
    %p128 = scmp.ne.s32.totalorder %s114, %s115
    %p129 = scmp.eq.s32.totalorder %s18, 1
    %p130 = por %p128, %p129
    %p132 = scmp.ne.s32.totalorder %s115, %s131
    %p133 = scmp.eq.s32.totalorder %s18, 0
    %p134 = por %p132, %p133
    %s135 = ssub.s32 %s19, %s31
    %p136 = scmp.eq.s32.totalorder %s135, 0
    %s138 = sadd.s32 %s137, 1
    %s139 = scalar_select %p136, %s137, %s138
    %p142 = pneg %p136
    %p143 = scmp.eq.s32.totalorder %s12, 1
    %p144 = por %p142, %p143
    %p145 = scmp.ne.s32.totalorder %s137, %s140
    %p146 = scmp.eq.s32.totalorder %s12, 0
    %p147 = por %p145, %p146
    %p148 = scmp.ne.s32.totalorder %s137, %s140
    %p149 = scmp.eq.s32.totalorder %s17, 1
    %p150 = por %p148, %p149
    %p151 = scmp.ne.s32.totalorder %s140, %s141
    %p152 = scmp.eq.s32.totalorder %s17, 0
    %p153 = por %p151, %p152
    %p154 = scmp.ne.s32.totalorder %s140, %s141
    %p155 = scmp.eq.s32.totalorder %s18, 1
    %p156 = por %p154, %p155
    %p158 = scmp.ne.s32.totalorder %s141, %s157
    %p159 = scmp.eq.s32.totalorder %s18, 0
    %p160 = por %p158, %p159
    %s161 = ssub.s32 %s19, %s31
    %p162 = scmp.eq.s32.totalorder %s161, 0
    %s164 = sadd.s32 %s163, 1
    %s165 = scalar_select %p162, %s163, %s164
    %p168 = pneg %p162
    %p169 = scmp.eq.s32.totalorder %s12, 1
    %p170 = por %p168, %p169
    %p171 = scmp.ne.s32.totalorder %s163, %s166
    %p172 = scmp.eq.s32.totalorder %s12, 0
    %p173 = por %p171, %p172
    %p174 = scmp.ne.s32.totalorder %s163, %s166
    %p175 = scmp.eq.s32.totalorder %s17, 1
    %p176 = por %p174, %p175
    %p177 = scmp.ne.s32.totalorder %s166, %s167
    %p178 = scmp.eq.s32.totalorder %s17, 0
    %p179 = por %p177, %p178
    %p180 = scmp.ne.s32.totalorder %s166, %s167
    %p181 = scmp.eq.s32.totalorder %s18, 1
    %p182 = por %p180, %p181
    %p184 = scmp.ne.s32.totalorder %s167, %s183
    %p185 = scmp.eq.s32.totalorder %s18, 0
    %p186 = por %p184, %p185
    %p187 = scmp.le.s32.totalorder 1, %s12
    %p188 = scmp.lt.s32.totalorder %s12, 3
    %p189 = pnand %p187, %p188
    %p190 = pneg %p189
    // Predicated region
    $region9: #{vfr_forward.2} parent=5 // pred_check
      _
    $region10: #{vfr_forward.2} parent=5 // pred_check_branch
      %192 = sbr.rel (%p189) target = $region12
    $region11: #{vfr_forward.2} parent=5 // pred_region
      %s193 = ssub.s32 %s12, 1
      // Predicated region
      $region13: #{vfr_forward.2} parent=11 // pred_check
        %p194 = pneg %p71
      $region14: #{vfr_forward.2} parent=11 // pred_check_branch
        %196 = sbr.rel (%p194) target = $region16
      $region15: #{vfr_forward.2} parent=11 // pred_region
        _
      $region16: #{vfr_forward.2} parent=11 // pred_fallthru
        _
    $region12: #{vfr_forward.2} parent=5 // pred_fallthru
      _
    %p197 = scmp.lt.s32.totalorder %s12, 2
    // Predicated region
    $region17: #{vfr_forward.2} parent=5 // pred_check
      %p198 = pneg %p197
    $region18: #{vfr_forward.2} parent=5 // pred_check_branch
      %200 = sbr.rel (%p198) target = $region20
    $region19: #{vfr_forward.2} parent=5 // pred_region
      // Predicated region
      $region21: #{vfr_forward.2} parent=19 // pred_check
        %p201 = pneg %p44
      $region22: #{vfr_forward.2} parent=19 // pred_check_branch
        %203 = sbr.rel (%p201) target = $region24
      $region23: #{vfr_forward.2} parent=19 // pred_region
        %p204 = scmp.lt.s32.totalorder %s19, 1
        %s205 = scalar_select %p204, %s19, 1
        %s206 = smul.addr %s205, 4
        %s207 = smul.addr %s206, 8
        %s208 = scalar_lea.vmem %s0, %s207
      $region24: #{vfr_forward.2} parent=19 // pred_fallthru
        _
      // Predicated region
      $region25: #{vfr_forward.2} parent=19 // pred_check
        %p209 = pneg %p93
      $region26: #{vfr_forward.2} parent=19 // pred_check_branch
        %211 = sbr.rel (%p209) target = $region28
      $region27: #{vfr_forward.2} parent=19 // pred_region
        %s212 = smul.u32 4, %s20
        %p213 = scmp.lt.s32.totalorder %s19, 1
        %s214 = scalar_select %p213, %s19, 1
        %p215 = scmp.lt.s32.totalorder %s212, 3
        %s216 = scalar_select %p215, %s212, 3
        %s217 = smul.addr %s214, 4
        %s218 = sadd.s32 %s216, %s217
        %s219 = smul.addr %s218, 8
        %s220 = scalar_lea.vmem %s2, %s219
        %s221 = smul.u32 4, %s20
      $region28: #{vfr_forward.2} parent=19 // pred_fallthru
        _
    $region20: #{vfr_forward.2} parent=5 // pred_fallthru
      _
    %p222 = scmp.le.s32.totalorder 1, %s12
    %p223 = scmp.lt.s32.totalorder %s12, 3
    %p224 = pnand %p222, %p223
    %p225 = pneg %p224
    // Predicated region
    $region29: #{vfr_forward.2} parent=5 // pred_check
      _
    $region30: #{vfr_forward.2} parent=5 // pred_check_branch
      %227 = sbr.rel (%p224) target = $region32
    $region31: #{vfr_forward.2} parent=5 // pred_region
      %s228 = ssub.s32 %s12, 1
      %p229 = scmp.lt.s32.totalorder %s21, 1
      %s230 = scalar_select %p229, %s21, 1
      %s231 = smul.addr %s230, 4
      %s232 = smul.addr %s231, 8
      %s233 = scalar_lea.vmem %s0, %s232
      %p234 = pneg %p50
      %p235 = pneg %p47
      %p236 = pneg %p71
      %p237 = pneg %p68
      %s238 = smul.u32 4, %s22
      %p239 = scmp.lt.s32.totalorder %s21, 1
      %s240 = scalar_select %p239, %s21, 1
      %p241 = scmp.lt.s32.totalorder %s238, 3
      %s242 = scalar_select %p241, %s238, 3
      %s243 = smul.addr %s240, 4
      %s244 = sadd.s32 %s242, %s243
      %s245 = smul.addr %s244, 8
      %s246 = scalar_lea.vmem %s2, %s245
      %p247 = pneg %p99
      %p248 = pneg %p96
      %p249 = pneg %p127
      %p250 = pneg %p124
      %s251 = smul.u32 4, %s22
      %p252 = scmp.lt.s32.totalorder %s21, 1
      %s253 = scalar_select %p252, %s21, 1
      %p254 = scmp.lt.s32.totalorder %s251, 3
      %s255 = scalar_select %p254, %s251, 3
      %s256 = smul.addr %s253, 4
      %s257 = sadd.s32 %s255, %s256
      %s258 = smul.addr %s257, 4
      %s259 = scalar_lea.vmem %s3, %s258
      %p260 = pneg %p153
      %p261 = pneg %p150
      %p262 = scmp.lt.s32.totalorder %s21, 1
      %s263 = scalar_select %p262, %s21, 1
      %s264 = scalar_lea.vmem %s4, %s263
      %p265 = pneg %p179
      %p266 = pneg %p176
      %p267 = scmp.lt.s32.totalorder %s21, 1
      %s268 = scalar_select %p267, %s21, 1
      %s269 = scalar_lea.vmem %s5, %s268
      %p270 = scmp.lt.s32.totalorder %s21, 1
      %s271 = scalar_select %p270, %s21, 1
      %s272 = smul.addr %s271, 4
      %s273 = smul.addr %s272, 8
      %s274 = scalar_lea.vmem %s0, %s273
      %s275 = smul.u32 4, %s22
      %p276 = scmp.lt.s32.totalorder %s21, 1
      %s277 = scalar_select %p276, %s21, 1
      %p278 = scmp.lt.s32.totalorder %s275, 3
      %s279 = scalar_select %p278, %s275, 3
      %s280 = smul.addr %s277, 4
      %s281 = sadd.s32 %s279, %s280
      %s282 = smul.addr %s281, 8
      %s283 = scalar_lea.vmem %s2, %s282
      %s284 = smul.u32 4, %s22
      %s285 = smul.u32 4, %s22
      %p286 = scmp.lt.s32.totalorder %s21, 1
      %s287 = scalar_select %p286, %s21, 1
      %p288 = scmp.lt.s32.totalorder %s285, 3
      %s289 = scalar_select %p288, %s285, 3
      %s290 = smul.addr %s287, 4
      %s291 = sadd.s32 %s289, %s290
      %s292 = smul.addr %s291, 4
      %s293 = scalar_lea.vmem %s3, %s292
      %s294 = smul.u32 4, %s22
      %p295 = scmp.lt.s32.totalorder %s21, 1
      %s296 = scalar_select %p295, %s21, 1
      %s297 = scalar_lea.vmem %s4, %s296
      %p298 = scmp.lt.s32.totalorder %s21, 1
      %s299 = scalar_select %p298, %s21, 1
      %s300 = scalar_lea.vmem %s5, %s299
      %p301 = scmp.eq.s32.totalorder %s22, 0
      // Predicated region
      $region33: #{vfr_forward.2} parent=31 // pred_check
        %p302 = pneg %p301
      $region34: #{vfr_forward.2} parent=31 // pred_check_branch
        %304 = sbr.rel (%p302) target = $region36
      $region35: #{vfr_forward.2} parent=31 // pred_region
        %v305 = vld [vmem:[%s274] sm:$0xff]
        %v306 = vld [vmem:[%s274 + $0x8] sm:$0xff]
        %v307 = vld [vmem:[%s274 + $0x10] sm:$0xff]
        %v308 = vld [vmem:[%s274 + $0x18] sm:$0xff]
        %v309 = vld [vmem:[%s1] sm:$0xff]
        %v310 = vld [vmem:[%s1 + $0x8] sm:$0xff]
        %vm311 = vcmask 130048
        %v313 = vsel %vm311, %v305, 0
        %v316 = vsel %vm311, %v306, 0
        %v319 = vsel %vm311, %v307, 0
        %v322 = vsel %vm311, %v308, 0
        %324 = vmatprep.subr.mxu0 0.0
        %325 = vmatpush1.msra.mxu0 0.0
        %326 = vmatprep.subr.mxu0 0.0
        %327 = vmatpush1.msra.mxu0 0.0
        %328 = vmatprep.subr.mxu0 0.0
        %329 = vmatpush1.msra.mxu0 0.0
        %330 = vmatprep.subr.mxu0 0.0
        %331 = vmatpush1.msra.mxu0 0.0
        %332 = vmatprep.subr.mxu0 0.0
        %333 = vmatpush1.msra.mxu0 0.0
        %334 = vmatprep.subr.mxu0 0.0
        %335 = vmatpush1.msra.mxu0 0.0
        %336 = vmatprep.subr.mxu0 0.0
        %337 = vmatpush1.msra.mxu0 0.0
        %338 = vmatprep.subr.mxu0 0.0
        %339 = vmatpush1.msra.mxu0 0.0
        %340 = vmatprep.subr.mxu0 0.0
        %341 = vmatpush1.msra.mxu0 0.0
        %342 = vmatprep.subr.mxu0 0.0
        %343 = vmatpush1.msra.mxu0 0.0
        %344 = vmatprep.subr.mxu0 0.0
        %345 = vmatpush1.msra.mxu0 0.0
        %346 = vmatprep.subr.mxu0 0.0
        %347 = vmatpush1.msra.mxu0 0.0
        %348 = vmatprep.subr.mxu0 0.0
        %349 = vmatpush1.msra.mxu0 0.0
        %350 = vmatprep.subr.mxu0 0.0
        %351 = vmatpush1.msra.mxu0 0.0
        %352 = vmatprep.subr.mxu0 0.0
        %353 = vmatpush1.msra.mxu0 %v310
        %354 = vmatprep.subr.mxu0 0.0
        %355 = vmatpush1.msra.mxu0 %v309
        %356 = vmatprep.subr.mxu0 0.0
        %357 = vmatpush2.msra.mxu0 0.0
        %358 = vmatprep.subr.mxu0 0.0
        %359 = vmatpush2.msra.mxu0 0.0
        %360 = vmatprep.subr.mxu0 0.0
        %361 = vmatpush2.msra.mxu0 0.0
        %362 = vmatprep.subr.mxu0 0.0
        %363 = vmatpush2.msra.mxu0 0.0
        %364 = vmatprep.subr.mxu0 0.0
        %365 = vmatpush2.msra.mxu0 0.0
        %366 = vmatprep.subr.mxu0 0.0
        %367 = vmatpush2.msra.mxu0 0.0
        %368 = vmatprep.subr.mxu0 0.0
        %369 = vmatpush2.msra.mxu0 0.0
        %370 = vmatprep.subr.mxu0 0.0
        %371 = vmatpush2.msra.mxu0 0.0
        %372 = vmatprep.subr.mxu0 0.0
        %373 = vmatpush2.msra.mxu0 0.0
        %374 = vmatprep.subr.mxu0 0.0
        %375 = vmatpush2.msra.mxu0 0.0
        %376 = vmatprep.subr.mxu0 0.0
        %377 = vmatpush2.msra.mxu0 0.0
        %378 = vmatprep.subr.mxu0 0.0
        %379 = vmatpush2.msra.mxu0 0.0
        %380 = vmatprep.subr.mxu0 0.0
        %381 = vmatpush2.msra.mxu0 0.0
        %382 = vmatprep.subr.mxu0 0.0
        %383 = vmatpush2.msra.mxu0 0.0
        %384 = vmatprep.subr.mxu0 0.0
        %385 = vmatpush2.msra.mxu0 0.0
        %386 = vmatprep.subr.mxu0 0.0
        %387 = vmatpush2.msra.mxu0 0.0
        %388 = vmatprep.mubr.f32.mxu0 0.0
        %389 = vmatmul.mubr.f32.gmra.mxu0 %v313
        %v390 = vpop.f32.mrf.mxu0
        %v391 = vadd.f32 0.0, %v390
        %v392 = vpop.f32.mrf.mxu0
        %393 = vmatprep.mubr.f32.mxu0 0.0
        %394 = vmatmul.mubr.f32.gmra.mxu0 %v316
        %v395 = vpop.f32.mrf.mxu0
        %v396 = vadd.f32 0.0, %v395
        %v397 = vpop.f32.mrf.mxu0
        %398 = vmatprep.mubr.f32.mxu0 0.0
        %399 = vmatmul.mubr.f32.gmra.mxu0 %v319
        %v400 = vpop.f32.mrf.mxu0
        %v401 = vadd.f32 0.0, %v400
        %v402 = vpop.f32.mrf.mxu0
        %403 = vmatprep.mubr.f32.mxu0 0.0
        %404 = vmatmul.mubr.f32.gmra.mxu0 %v322
        %v405 = vpop.f32.mrf.mxu0
        %v406 = vadd.f32 0.0, %v405
        %v407 = vpop.f32.mrf.mxu0
        %408 = vdwg.mxu0
        %vm409 = vcmask 261120
        %410 = vst.msk [vmem:[#allocation2] sm:$0xff] %vm409, %v391
        %411 = vst.msk [vmem:[#allocation2 + $0x8] sm:$0xff] %vm409, %v396
        %412 = vst.msk [vmem:[#allocation2 + $0x10] sm:$0xff] %vm409, %v401
        %413 = vst.msk [vmem:[#allocation2 + $0x18] sm:$0xff] %vm409, %v406
        %vm414 = vcmask 253952
        %415 = vst.msk [vmem:[%s297] sm:$0x1] %vm414, 0.0
        %416 = vst.msk [vmem:[%s300] sm:$0x1] %vm414, 0.0
      $region36: #{vfr_forward.2} parent=31 // pred_fallthru
        _
      %v417 = vld [vmem:[#allocation2] sm:$0xff]
      %v418 = vld [vmem:[#allocation2 + $0x8] sm:$0xff]
      %v419 = vld [vmem:[#allocation2 + $0x10] sm:$0xff]
      %v420 = vld [vmem:[#allocation2 + $0x18] sm:$0xff]
      %v421 = vld [vmem:[%s283] sm:$0xff]
      %v422 = vld [vmem:[%s283 + $0x8] sm:$0xff]
      %v423 = vld [vmem:[%s283 + $0x10] sm:$0xff]
      %v424 = vld [vmem:[%s283 + $0x18] sm:$0xff]
      %s425 = smul.u32 %s22, 32
      %s426 = scalar_lea.vmem [#allocation2], %s425
      %v427 = vld [vmem:[%s426] sm:$0xff]
      %v428 = vld [vmem:[%s426 + $0x8] sm:$0xff]
      %v429 = vld [vmem:[%s426 + $0x10] sm:$0xff]
      %v430 = vld [vmem:[%s426 + $0x18] sm:$0xff]
      %v431 = vlaneseq
      %v432 = vand.u32 %v431, 127
      %433 = vset.pattern.permute.xlu0 0
      %434 = vperm.xlu0 %433, %v421
      %v435 = vpop.permute.xlu0 %434
      %436 = vset.pattern.permute.xlu0 0
      %437 = vperm.xlu0 %436, %v422
      %v438 = vpop.permute.xlu0 %437
      %439 = vset.pattern.permute.xlu0 0
      %440 = vperm.xlu0 %439, %v423
      %v441 = vpop.permute.xlu0 %440
      %442 = vset.pattern.permute.xlu0 0
      %443 = vperm.xlu0 %442, %v424
      %v444 = vpop.permute.xlu0 %443
      %vm445 = vcmp.eq.s32.totalorder %v432, %v435
      %vm446 = vcmp.eq.s32.totalorder %v432, %v438
      %vm447 = vcmp.eq.s32.totalorder %v432, %v441
      %vm448 = vcmp.eq.s32.totalorder %v432, %v444
      %v449 = vsel %vm445, 1, 0
      %v450 = vsel %vm446, 1, 0
      %v451 = vsel %vm447, 1, 0
      %v452 = vsel %vm448, 1, 0
      %v453 = vcvt.s32.f32 %v449
      %v454 = vcvt.s32.f32 %v450
      %v455 = vcvt.s32.f32 %v451
      %v456 = vcvt.s32.f32 %v452
      %vm457 = vcmask 261120
      %v459 = vsel %vm457, %v453, 0
      %v462 = vsel %vm457, %v454, 0
      %v465 = vsel %vm457, %v455, 0
      %v468 = vsel %vm457, %v456, 0
      %470 = vmatprep.subr.mxu0 0.0
      %471 = vmatpush1.msra.mxu0 0.0
      %472 = vmatprep.subr.mxu0 0.0
      %473 = vmatpush1.msra.mxu0 0.0
      %474 = vmatprep.subr.mxu0 0.0
      %475 = vmatpush1.msra.mxu0 0.0
      %476 = vmatprep.subr.mxu0 0.0
      %477 = vmatpush1.msra.mxu0 0.0
      %478 = vmatprep.subr.mxu0 0.0
      %479 = vmatpush1.msra.mxu0 0.0
      %480 = vmatprep.subr.mxu0 0.0
      %481 = vmatpush1.msra.mxu0 0.0
      %482 = vmatprep.subr.mxu0 0.0
      %483 = vmatpush1.msra.mxu0 0.0
      %484 = vmatprep.subr.mxu0 0.0
      %485 = vmatpush1.msra.mxu0 0.0
      %486 = vmatprep.subr.mxu0 0.0
      %487 = vmatpush1.msra.mxu0 0.0
      %488 = vmatprep.subr.mxu0 0.0
      %489 = vmatpush1.msra.mxu0 0.0
      %490 = vmatprep.subr.mxu0 0.0
      %491 = vmatpush1.msra.mxu0 0.0
      %492 = vmatprep.subr.mxu0 0.0
      %493 = vmatpush1.msra.mxu0 0.0
      %494 = vmatprep.subr.mxu0 0.0
      %495 = vmatpush1.msra.mxu0 %v420
      %496 = vmatprep.subr.mxu0 0.0
      %497 = vmatpush1.msra.mxu0 %v419
      %498 = vmatprep.subr.mxu0 0.0
      %499 = vmatpush1.msra.mxu0 %v418
      %500 = vmatprep.subr.mxu0 0.0
      %501 = vmatpush1.msra.mxu0 %v417
      %502 = vmatprep.subr.mxu0 0.0
      %503 = vmatpush2.msra.mxu0 0.0
      %504 = vmatprep.subr.mxu0 0.0
      %505 = vmatpush2.msra.mxu0 0.0
      %506 = vmatprep.subr.mxu0 0.0
      %507 = vmatpush2.msra.mxu0 0.0
      %508 = vmatprep.subr.mxu0 0.0
      %509 = vmatpush2.msra.mxu0 0.0
      %510 = vmatprep.subr.mxu0 0.0
      %511 = vmatpush2.msra.mxu0 0.0
      %512 = vmatprep.subr.mxu0 0.0
      %513 = vmatpush2.msra.mxu0 0.0
      %514 = vmatprep.subr.mxu0 0.0
      %515 = vmatpush2.msra.mxu0 0.0
      %516 = vmatprep.subr.mxu0 0.0
      %517 = vmatpush2.msra.mxu0 0.0
      %518 = vmatprep.subr.mxu0 0.0
      %519 = vmatpush2.msra.mxu0 0.0
      %520 = vmatprep.subr.mxu0 0.0
      %521 = vmatpush2.msra.mxu0 0.0
      %522 = vmatprep.subr.mxu0 0.0
      %523 = vmatpush2.msra.mxu0 0.0
      %524 = vmatprep.subr.mxu0 0.0
      %525 = vmatpush2.msra.mxu0 0.0
      %526 = vmatprep.subr.mxu0 0.0
      %527 = vmatpush2.msra.mxu0 0.0
      %528 = vmatprep.subr.mxu0 0.0
      %529 = vmatpush2.msra.mxu0 0.0
      %530 = vmatprep.subr.mxu0 0.0
      %531 = vmatpush2.msra.mxu0 0.0
      %532 = vmatprep.subr.mxu0 0.0
      %533 = vmatpush2.msra.mxu0 0.0
      %534 = vmatprep.mubr.f32.mxu0 0.0
      %535 = vmatmul.mubr.f32.gmra.mxu0 %v459
      %v536 = vpop.f32.mrf.mxu0
      %v537 = vadd.f32 0.0, %v536
      %v538 = vpop.f32.mrf.mxu0
      %539 = vmatprep.mubr.f32.mxu0 0.0
      %540 = vmatmul.mubr.f32.gmra.mxu0 %v462
      %v541 = vpop.f32.mrf.mxu0
      %v542 = vadd.f32 0.0, %v541
      %v543 = vpop.f32.mrf.mxu0
      %544 = vmatprep.mubr.f32.mxu0 0.0
      %545 = vmatmul.mubr.f32.gmra.mxu0 %v465
      %v546 = vpop.f32.mrf.mxu0
      %v547 = vadd.f32 0.0, %v546
      %v548 = vpop.f32.mrf.mxu0
      %549 = vmatprep.mubr.f32.mxu0 0.0
      %550 = vmatmul.mubr.f32.gmra.mxu0 %v468
      %v551 = vpop.f32.mrf.mxu0
      %v552 = vadd.f32 0.0, %v551
      %v553 = vpop.f32.mrf.mxu0
      %554 = vdwg.mxu0
      %555 = vset.pattern.permute.xlu0 1
      %556 = vperm.xlu0 %555, %v421
      %v557 = vpop.permute.xlu0 %556
      %558 = vset.pattern.permute.xlu0 1
      %559 = vperm.xlu0 %558, %v422
      %v560 = vpop.permute.xlu0 %559
      %561 = vset.pattern.permute.xlu0 1
      %562 = vperm.xlu0 %561, %v423
      %v563 = vpop.permute.xlu0 %562
      %564 = vset.pattern.permute.xlu0 1
      %565 = vperm.xlu0 %564, %v424
      %v566 = vpop.permute.xlu0 %565
      %vm567 = vcmp.eq.s32.totalorder %v432, %v557
      %vm568 = vcmp.eq.s32.totalorder %v432, %v560
      %vm569 = vcmp.eq.s32.totalorder %v432, %v563
      %vm570 = vcmp.eq.s32.totalorder %v432, %v566
      %v571 = vsel %vm567, 1, 0
      %v572 = vsel %vm568, 1, 0
      %v573 = vsel %vm569, 1, 0
      %v574 = vsel %vm570, 1, 0
      %v575 = vcvt.s32.f32 %v571
      %v576 = vcvt.s32.f32 %v572
      %v577 = vcvt.s32.f32 %v573
      %v578 = vcvt.s32.f32 %v574
      %v580 = vsel %vm457, %v575, 0
      %v583 = vsel %vm457, %v576, 0
      %v586 = vsel %vm457, %v577, 0
      %v589 = vsel %vm457, %v578, 0
      %591 = vmatprep.subr.mxu0 0.0
      %592 = vmatpush1.msra.mxu0 0.0
      %593 = vmatprep.subr.mxu0 0.0
      %594 = vmatpush1.msra.mxu0 0.0
      %595 = vmatprep.subr.mxu0 0.0
      %596 = vmatpush1.msra.mxu0 0.0
      %597 = vmatprep.subr.mxu0 0.0
      %598 = vmatpush1.msra.mxu0 0.0
      %599 = vmatprep.subr.mxu0 0.0
      %600 = vmatpush1.msra.mxu0 0.0
      %601 = vmatprep.subr.mxu0 0.0
      %602 = vmatpush1.msra.mxu0 0.0
      %603 = vmatprep.subr.mxu0 0.0
      %604 = vmatpush1.msra.mxu0 0.0
      %605 = vmatprep.subr.mxu0 0.0
      %606 = vmatpush1.msra.mxu0 0.0
      %607 = vmatprep.subr.mxu0 0.0
      %608 = vmatpush1.msra.mxu0 0.0
      %609 = vmatprep.subr.mxu0 0.0
      %610 = vmatpush1.msra.mxu0 0.0
      %611 = vmatprep.subr.mxu0 0.0
      %612 = vmatpush1.msra.mxu0 0.0
      %613 = vmatprep.subr.mxu0 0.0
      %614 = vmatpush1.msra.mxu0 0.0
      %615 = vmatprep.subr.mxu0 0.0
      %616 = vmatpush1.msra.mxu0 %v420
      %617 = vmatprep.subr.mxu0 0.0
      %618 = vmatpush1.msra.mxu0 %v419
      %619 = vmatprep.subr.mxu0 0.0
      %620 = vmatpush1.msra.mxu0 %v418
      %621 = vmatprep.subr.mxu0 0.0
      %622 = vmatpush1.msra.mxu0 %v417
      %623 = vmatprep.subr.mxu0 0.0
      %624 = vmatpush2.msra.mxu0 0.0
      %625 = vmatprep.subr.mxu0 0.0
      %626 = vmatpush2.msra.mxu0 0.0
      %627 = vmatprep.subr.mxu0 0.0
      %628 = vmatpush2.msra.mxu0 0.0
      %629 = vmatprep.subr.mxu0 0.0
      %630 = vmatpush2.msra.mxu0 0.0
      %631 = vmatprep.subr.mxu0 0.0
      %632 = vmatpush2.msra.mxu0 0.0
      %633 = vmatprep.subr.mxu0 0.0
      %634 = vmatpush2.msra.mxu0 0.0
      %635 = vmatprep.subr.mxu0 0.0
      %636 = vmatpush2.msra.mxu0 0.0
      %637 = vmatprep.subr.mxu0 0.0
      %638 = vmatpush2.msra.mxu0 0.0
      %639 = vmatprep.subr.mxu0 0.0
      %640 = vmatpush2.msra.mxu0 0.0
      %641 = vmatprep.subr.mxu0 0.0
      %642 = vmatpush2.msra.mxu0 0.0
      %643 = vmatprep.subr.mxu0 0.0
      %644 = vmatpush2.msra.mxu0 0.0
      %645 = vmatprep.subr.mxu0 0.0
      %646 = vmatpush2.msra.mxu0 0.0
      %647 = vmatprep.subr.mxu0 0.0
      %648 = vmatpush2.msra.mxu0 0.0
      %649 = vmatprep.subr.mxu0 0.0
      %650 = vmatpush2.msra.mxu0 0.0
      %651 = vmatprep.subr.mxu0 0.0
      %652 = vmatpush2.msra.mxu0 0.0
      %653 = vmatprep.subr.mxu0 0.0
      %654 = vmatpush2.msra.mxu0 0.0
      %655 = vmatprep.mubr.f32.mxu0 0.0
      %656 = vmatmul.mubr.f32.gmra.mxu0 %v580
      %v657 = vpop.f32.mrf.mxu0
      %v658 = vadd.f32 0.0, %v657
      %v659 = vpop.f32.mrf.mxu0
      %660 = vmatprep.mubr.f32.mxu0 0.0
      %661 = vmatmul.mubr.f32.gmra.mxu0 %v583
      %v662 = vpop.f32.mrf.mxu0
      %v663 = vadd.f32 0.0, %v662
      %v664 = vpop.f32.mrf.mxu0
      %665 = vmatprep.mubr.f32.mxu0 0.0
      %666 = vmatmul.mubr.f32.gmra.mxu0 %v586
      %v667 = vpop.f32.mrf.mxu0
      %v668 = vadd.f32 0.0, %v667
      %v669 = vpop.f32.mrf.mxu0
      %670 = vmatprep.mubr.f32.mxu0 0.0
      %671 = vmatmul.mubr.f32.gmra.mxu0 %v589
      %v672 = vpop.f32.mrf.mxu0
      %v673 = vadd.f32 0.0, %v672
      %v674 = vpop.f32.mrf.mxu0
      %675 = vdwg.mxu0
      %v676 = vmax.f32 %v537, %v658
      %v677 = vmax.f32 %v542, %v663
      %v678 = vmax.f32 %v547, %v668
      %v679 = vmax.f32 %v552, %v673
      %680 = vset.pattern.permute.xlu0 2
      %681 = vperm.xlu0 %680, %v421
      %v682 = vpop.permute.xlu0 %681
      %683 = vset.pattern.permute.xlu0 2
      %684 = vperm.xlu0 %683, %v422
      %v685 = vpop.permute.xlu0 %684
      %686 = vset.pattern.permute.xlu0 2
      %687 = vperm.xlu0 %686, %v423
      %v688 = vpop.permute.xlu0 %687
      %689 = vset.pattern.permute.xlu0 2
      %690 = vperm.xlu0 %689, %v424
      %v691 = vpop.permute.xlu0 %690
      %vm692 = vcmp.eq.s32.totalorder %v432, %v682
      %vm693 = vcmp.eq.s32.totalorder %v432, %v685
      %vm694 = vcmp.eq.s32.totalorder %v432, %v688
      %vm695 = vcmp.eq.s32.totalorder %v432, %v691
      %v696 = vsel %vm692, 1, 0
      %v697 = vsel %vm693, 1, 0
      %v698 = vsel %vm694, 1, 0
      %v699 = vsel %vm695, 1, 0
      %v700 = vcvt.s32.f32 %v696
      %v701 = vcvt.s32.f32 %v697
      %v702 = vcvt.s32.f32 %v698
      %v703 = vcvt.s32.f32 %v699
      %v705 = vsel %vm457, %v700, 0
      %v708 = vsel %vm457, %v701, 0
      %v711 = vsel %vm457, %v702, 0
      %v714 = vsel %vm457, %v703, 0
      %716 = vmatprep.subr.mxu0 0.0
      %717 = vmatpush1.msra.mxu0 0.0
      %718 = vmatprep.subr.mxu0 0.0
      %719 = vmatpush1.msra.mxu0 0.0
      %720 = vmatprep.subr.mxu0 0.0
      %721 = vmatpush1.msra.mxu0 0.0
      %722 = vmatprep.subr.mxu0 0.0
      %723 = vmatpush1.msra.mxu0 0.0
      %724 = vmatprep.subr.mxu0 0.0
      %725 = vmatpush1.msra.mxu0 0.0
      %726 = vmatprep.subr.mxu0 0.0
      %727 = vmatpush1.msra.mxu0 0.0
      %728 = vmatprep.subr.mxu0 0.0
      %729 = vmatpush1.msra.mxu0 0.0
      %730 = vmatprep.subr.mxu0 0.0
      %731 = vmatpush1.msra.mxu0 0.0
      %732 = vmatprep.subr.mxu0 0.0
      %733 = vmatpush1.msra.mxu0 0.0
      %734 = vmatprep.subr.mxu0 0.0
      %735 = vmatpush1.msra.mxu0 0.0
      %736 = vmatprep.subr.mxu0 0.0
      %737 = vmatpush1.msra.mxu0 0.0
      %738 = vmatprep.subr.mxu0 0.0
      %739 = vmatpush1.msra.mxu0 0.0
      %740 = vmatprep.subr.mxu0 0.0
      %741 = vmatpush1.msra.mxu0 %v420
      %742 = vmatprep.subr.mxu0 0.0
      %743 = vmatpush1.msra.mxu0 %v419
      %744 = vmatprep.subr.mxu0 0.0
      %745 = vmatpush1.msra.mxu0 %v418
      %746 = vmatprep.subr.mxu0 0.0
      %747 = vmatpush1.msra.mxu0 %v417
      %748 = vmatprep.subr.mxu0 0.0
      %749 = vmatpush2.msra.mxu0 0.0
      %750 = vmatprep.subr.mxu0 0.0
      %751 = vmatpush2.msra.mxu0 0.0
      %752 = vmatprep.subr.mxu0 0.0
      %753 = vmatpush2.msra.mxu0 0.0
      %754 = vmatprep.subr.mxu0 0.0
      %755 = vmatpush2.msra.mxu0 0.0
      %756 = vmatprep.subr.mxu0 0.0
      %757 = vmatpush2.msra.mxu0 0.0
      %758 = vmatprep.subr.mxu0 0.0
      %759 = vmatpush2.msra.mxu0 0.0
      %760 = vmatprep.subr.mxu0 0.0
      %761 = vmatpush2.msra.mxu0 0.0
      %762 = vmatprep.subr.mxu0 0.0
      %763 = vmatpush2.msra.mxu0 0.0
      %764 = vmatprep.subr.mxu0 0.0
      %765 = vmatpush2.msra.mxu0 0.0
      %766 = vmatprep.subr.mxu0 0.0
      %767 = vmatpush2.msra.mxu0 0.0
      %768 = vmatprep.subr.mxu0 0.0
      %769 = vmatpush2.msra.mxu0 0.0
      %770 = vmatprep.subr.mxu0 0.0
      %771 = vmatpush2.msra.mxu0 0.0
      %772 = vmatprep.subr.mxu0 0.0
      %773 = vmatpush2.msra.mxu0 0.0
      %774 = vmatprep.subr.mxu0 0.0
      %775 = vmatpush2.msra.mxu0 0.0
      %776 = vmatprep.subr.mxu0 0.0
      %777 = vmatpush2.msra.mxu0 0.0
      %778 = vmatprep.subr.mxu0 0.0
      %779 = vmatpush2.msra.mxu0 0.0
      %780 = vmatprep.mubr.f32.mxu0 0.0
      %781 = vmatmul.mubr.f32.gmra.mxu0 %v705
      %v782 = vpop.f32.mrf.mxu0
      %v783 = vadd.f32 0.0, %v782
      %v784 = vpop.f32.mrf.mxu0
      %785 = vmatprep.mubr.f32.mxu0 0.0
      %786 = vmatmul.mubr.f32.gmra.mxu0 %v708
      %v787 = vpop.f32.mrf.mxu0
      %v788 = vadd.f32 0.0, %v787
      %v789 = vpop.f32.mrf.mxu0
      %790 = vmatprep.mubr.f32.mxu0 0.0
      %791 = vmatmul.mubr.f32.gmra.mxu0 %v711
      %v792 = vpop.f32.mrf.mxu0
      %v793 = vadd.f32 0.0, %v792
      %v794 = vpop.f32.mrf.mxu0
      %795 = vmatprep.mubr.f32.mxu0 0.0
      %796 = vmatmul.mubr.f32.gmra.mxu0 %v714
      %v797 = vpop.f32.mrf.mxu0
      %v798 = vadd.f32 0.0, %v797
      %v799 = vpop.f32.mrf.mxu0
      %800 = vdwg.mxu0
      %v801 = vmax.f32 %v676, %v783
      %v802 = vmax.f32 %v677, %v788
      %v803 = vmax.f32 %v678, %v793
      %v804 = vmax.f32 %v679, %v798
      %805 = vset.pattern.permute.xlu0 3
      %806 = vperm.xlu0 %805, %v421
      %v807 = vpop.permute.xlu0 %806
      %808 = vset.pattern.permute.xlu0 3
      %809 = vperm.xlu0 %808, %v422
      %v810 = vpop.permute.xlu0 %809
      %811 = vset.pattern.permute.xlu0 3
      %812 = vperm.xlu0 %811, %v423
      %v813 = vpop.permute.xlu0 %812
      %814 = vset.pattern.permute.xlu0 3
      %815 = vperm.xlu0 %814, %v424
      %v816 = vpop.permute.xlu0 %815
      %vm817 = vcmp.eq.s32.totalorder %v432, %v807
      %vm818 = vcmp.eq.s32.totalorder %v432, %v810
      %vm819 = vcmp.eq.s32.totalorder %v432, %v813
      %vm820 = vcmp.eq.s32.totalorder %v432, %v816
      %v821 = vsel %vm817, 1, 0
      %v822 = vsel %vm818, 1, 0
      %v823 = vsel %vm819, 1, 0
      %v824 = vsel %vm820, 1, 0
      %v825 = vcvt.s32.f32 %v821
      %v826 = vcvt.s32.f32 %v822
      %v827 = vcvt.s32.f32 %v823
      %v828 = vcvt.s32.f32 %v824
      %v830 = vsel %vm457, %v825, 0
      %v833 = vsel %vm457, %v826, 0
      %v836 = vsel %vm457, %v827, 0
      %v839 = vsel %vm457, %v828, 0
      %841 = vmatprep.subr.mxu0 0.0
      %842 = vmatpush1.msra.mxu0 0.0
      %843 = vmatprep.subr.mxu0 0.0
      %844 = vmatpush1.msra.mxu0 0.0
      %845 = vmatprep.subr.mxu0 0.0
      %846 = vmatpush1.msra.mxu0 0.0
      %847 = vmatprep.subr.mxu0 0.0
      %848 = vmatpush1.msra.mxu0 0.0
      %849 = vmatprep.subr.mxu0 0.0
      %850 = vmatpush1.msra.mxu0 0.0
      %851 = vmatprep.subr.mxu0 0.0
      %852 = vmatpush1.msra.mxu0 0.0
      %853 = vmatprep.subr.mxu0 0.0
      %854 = vmatpush1.msra.mxu0 0.0
      %855 = vmatprep.subr.mxu0 0.0
      %856 = vmatpush1.msra.mxu0 0.0
      %857 = vmatprep.subr.mxu0 0.0
      %858 = vmatpush1.msra.mxu0 0.0
      %859 = vmatprep.subr.mxu0 0.0
      %860 = vmatpush1.msra.mxu0 0.0
      %861 = vmatprep.subr.mxu0 0.0
      %862 = vmatpush1.msra.mxu0 0.0
      %863 = vmatprep.subr.mxu0 0.0
      %864 = vmatpush1.msra.mxu0 0.0
      %865 = vmatprep.subr.mxu0 0.0
      %866 = vmatpush1.msra.mxu0 %v420
      %867 = vmatprep.subr.mxu0 0.0
      %868 = vmatpush1.msra.mxu0 %v419
      %869 = vmatprep.subr.mxu0 0.0
      %870 = vmatpush1.msra.mxu0 %v418
      %871 = vmatprep.subr.mxu0 0.0
      %872 = vmatpush1.msra.mxu0 %v417
      %873 = vmatprep.subr.mxu0 0.0
      %874 = vmatpush2.msra.mxu0 0.0
      %875 = vmatprep.subr.mxu0 0.0
      %876 = vmatpush2.msra.mxu0 0.0
      %877 = vmatprep.subr.mxu0 0.0
      %878 = vmatpush2.msra.mxu0 0.0
      %879 = vmatprep.subr.mxu0 0.0
      %880 = vmatpush2.msra.mxu0 0.0
      %881 = vmatprep.subr.mxu0 0.0
      %882 = vmatpush2.msra.mxu0 0.0
      %883 = vmatprep.subr.mxu0 0.0
      %884 = vmatpush2.msra.mxu0 0.0
      %885 = vmatprep.subr.mxu0 0.0
      %886 = vmatpush2.msra.mxu0 0.0
      %887 = vmatprep.subr.mxu0 0.0
      %888 = vmatpush2.msra.mxu0 0.0
      %889 = vmatprep.subr.mxu0 0.0
      %890 = vmatpush2.msra.mxu0 0.0
      %891 = vmatprep.subr.mxu0 0.0
      %892 = vmatpush2.msra.mxu0 0.0
      %893 = vmatprep.subr.mxu0 0.0
      %894 = vmatpush2.msra.mxu0 0.0
      %895 = vmatprep.subr.mxu0 0.0
      %896 = vmatpush2.msra.mxu0 0.0
      %897 = vmatprep.subr.mxu0 0.0
      %898 = vmatpush2.msra.mxu0 0.0
      %899 = vmatprep.subr.mxu0 0.0
      %900 = vmatpush2.msra.mxu0 0.0
      %901 = vmatprep.subr.mxu0 0.0
      %902 = vmatpush2.msra.mxu0 0.0
      %903 = vmatprep.subr.mxu0 0.0
      %904 = vmatpush2.msra.mxu0 0.0
      %905 = vmatprep.mubr.f32.mxu0 0.0
      %906 = vmatmul.mubr.f32.gmra.mxu0 %v830
      %v907 = vpop.f32.mrf.mxu0
      %v908 = vadd.f32 0.0, %v907
      %v909 = vpop.f32.mrf.mxu0
      %910 = vmatprep.mubr.f32.mxu0 0.0
      %911 = vmatmul.mubr.f32.gmra.mxu0 %v833
      %v912 = vpop.f32.mrf.mxu0
      %v913 = vadd.f32 0.0, %v912
      %v914 = vpop.f32.mrf.mxu0
      %915 = vmatprep.mubr.f32.mxu0 0.0
      %916 = vmatmul.mubr.f32.gmra.mxu0 %v836
      %v917 = vpop.f32.mrf.mxu0
      %v918 = vadd.f32 0.0, %v917
      %v919 = vpop.f32.mrf.mxu0
      %920 = vmatprep.mubr.f32.mxu0 0.0
      %921 = vmatmul.mubr.f32.gmra.mxu0 %v839
      %v922 = vpop.f32.mrf.mxu0
      %v923 = vadd.f32 0.0, %v922
      %v924 = vpop.f32.mrf.mxu0
      %925 = vdwg.mxu0
      %v926 = vmax.f32 %v801, %v908
      %v927 = vmax.f32 %v802, %v913
      %v928 = vmax.f32 %v803, %v918
      %v929 = vmax.f32 %v804, %v923
      %930 = vset.pattern.permute.xlu0 4
      %931 = vperm.xlu0 %930, %v421
      %v932 = vpop.permute.xlu0 %931
      %933 = vset.pattern.permute.xlu0 4
      %934 = vperm.xlu0 %933, %v422
      %v935 = vpop.permute.xlu0 %934
      %936 = vset.pattern.permute.xlu0 4
      %937 = vperm.xlu0 %936, %v423
      %v938 = vpop.permute.xlu0 %937
      %939 = vset.pattern.permute.xlu0 4
      %940 = vperm.xlu0 %939, %v424
      %v941 = vpop.permute.xlu0 %940
      %vm942 = vcmp.eq.s32.totalorder %v432, %v932
      %vm943 = vcmp.eq.s32.totalorder %v432, %v935
      %vm944 = vcmp.eq.s32.totalorder %v432, %v938
      %vm945 = vcmp.eq.s32.totalorder %v432, %v941
      %v946 = vsel %vm942, 1, 0
      %v947 = vsel %vm943, 1, 0
      %v948 = vsel %vm944, 1, 0
      %v949 = vsel %vm945, 1, 0
      %v950 = vcvt.s32.f32 %v946
      %v951 = vcvt.s32.f32 %v947
      %v952 = vcvt.s32.f32 %v948
      %v953 = vcvt.s32.f32 %v949
      %v955 = vsel %vm457, %v950, 0
      %v958 = vsel %vm457, %v951, 0
      %v961 = vsel %vm457, %v952, 0
      %v964 = vsel %vm457, %v953, 0
      %966 = vmatprep.subr.mxu0 0.0
      %967 = vmatpush1.msra.mxu0 0.0
      %968 = vmatprep.subr.mxu0 0.0
      %969 = vmatpush1.msra.mxu0 0.0
      %970 = vmatprep.subr.mxu0 0.0
      %971 = vmatpush1.msra.mxu0 0.0
      %972 = vmatprep.subr.mxu0 0.0
      %973 = vmatpush1.msra.mxu0 0.0
      %974 = vmatprep.subr.mxu0 0.0
      %975 = vmatpush1.msra.mxu0 0.0
      %976 = vmatprep.subr.mxu0 0.0
      %977 = vmatpush1.msra.mxu0 0.0
      %978 = vmatprep.subr.mxu0 0.0
      %979 = vmatpush1.msra.mxu0 0.0
      %980 = vmatprep.subr.mxu0 0.0
      %981 = vmatpush1.msra.mxu0 0.0
      %982 = vmatprep.subr.mxu0 0.0
      %983 = vmatpush1.msra.mxu0 0.0
      %984 = vmatprep.subr.mxu0 0.0
      %985 = vmatpush1.msra.mxu0 0.0
      %986 = vmatprep.subr.mxu0 0.0
      %987 = vmatpush1.msra.mxu0 0.0
      %988 = vmatprep.subr.mxu0 0.0
      %989 = vmatpush1.msra.mxu0 0.0
      %990 = vmatprep.subr.mxu0 0.0
      %991 = vmatpush1.msra.mxu0 %v420
      %992 = vmatprep.subr.mxu0 0.0
      %993 = vmatpush1.msra.mxu0 %v419
      %994 = vmatprep.subr.mxu0 0.0
      %995 = vmatpush1.msra.mxu0 %v418
      %996 = vmatprep.subr.mxu0 0.0
      %997 = vmatpush1.msra.mxu0 %v417
      %998 = vmatprep.subr.mxu0 0.0
      %999 = vmatpush2.msra.mxu0 0.0
      %1000 = vmatprep.subr.mxu0 0.0
      %1001 = vmatpush2.msra.mxu0 0.0
      %1002 = vmatprep.subr.mxu0 0.0
      %1003 = vmatpush2.msra.mxu0 0.0
      %1004 = vmatprep.subr.mxu0 0.0
      %1005 = vmatpush2.msra.mxu0 0.0
      %1006 = vmatprep.subr.mxu0 0.0
      %1007 = vmatpush2.msra.mxu0 0.0
      %1008 = vmatprep.subr.mxu0 0.0
      %1009 = vmatpush2.msra.mxu0 0.0
      %1010 = vmatprep.subr.mxu0 0.0
      %1011 = vmatpush2.msra.mxu0 0.0
      %1012 = vmatprep.subr.mxu0 0.0
      %1013 = vmatpush2.msra.mxu0 0.0
      %1014 = vmatprep.subr.mxu0 0.0
      %1015 = vmatpush2.msra.mxu0 0.0
      %1016 = vmatprep.subr.mxu0 0.0
      %1017 = vmatpush2.msra.mxu0 0.0
      %1018 = vmatprep.subr.mxu0 0.0
      %1019 = vmatpush2.msra.mxu0 0.0
      %1020 = vmatprep.subr.mxu0 0.0
      %1021 = vmatpush2.msra.mxu0 0.0
      %1022 = vmatprep.subr.mxu0 0.0
      %1023 = vmatpush2.msra.mxu0 0.0
      %1024 = vmatprep.subr.mxu0 0.0
      %1025 = vmatpush2.msra.mxu0 0.0
      %1026 = vmatprep.subr.mxu0 0.0
      %1027 = vmatpush2.msra.mxu0 0.0
      %1028 = vmatprep.subr.mxu0 0.0
      %1029 = vmatpush2.msra.mxu0 0.0
      %1030 = vmatprep.mubr.f32.mxu0 0.0
      %1031 = vmatmul.mubr.f32.gmra.mxu0 %v955
      %v1032 = vpop.f32.mrf.mxu0
      %v1033 = vadd.f32 0.0, %v1032
      %v1034 = vpop.f32.mrf.mxu0
      %1035 = vmatprep.mubr.f32.mxu0 0.0
      %1036 = vmatmul.mubr.f32.gmra.mxu0 %v958
      %v1037 = vpop.f32.mrf.mxu0
      %v1038 = vadd.f32 0.0, %v1037
      %v1039 = vpop.f32.mrf.mxu0
      %1040 = vmatprep.mubr.f32.mxu0 0.0
      %1041 = vmatmul.mubr.f32.gmra.mxu0 %v961
      %v1042 = vpop.f32.mrf.mxu0
      %v1043 = vadd.f32 0.0, %v1042
      %v1044 = vpop.f32.mrf.mxu0
      %1045 = vmatprep.mubr.f32.mxu0 0.0
      %1046 = vmatmul.mubr.f32.gmra.mxu0 %v964
      %v1047 = vpop.f32.mrf.mxu0
      %v1048 = vadd.f32 0.0, %v1047
      %v1049 = vpop.f32.mrf.mxu0
      %1050 = vdwg.mxu0
      %v1051 = vmax.f32 %v926, %v1033
      %v1052 = vmax.f32 %v927, %v1038
      %v1053 = vmax.f32 %v928, %v1043
      %v1054 = vmax.f32 %v929, %v1048
      %1055 = vset.pattern.permute.xlu0 5
      %1056 = vperm.xlu0 %1055, %v421
      %v1057 = vpop.permute.xlu0 %1056
      %1058 = vset.pattern.permute.xlu0 5
      %1059 = vperm.xlu0 %1058, %v422
      %v1060 = vpop.permute.xlu0 %1059
      %1061 = vset.pattern.permute.xlu0 5
      %1062 = vperm.xlu0 %1061, %v423
      %v1063 = vpop.permute.xlu0 %1062
      %1064 = vset.pattern.permute.xlu0 5
      %1065 = vperm.xlu0 %1064, %v424
      %v1066 = vpop.permute.xlu0 %1065
      %vm1067 = vcmp.eq.s32.totalorder %v432, %v1057
      %vm1068 = vcmp.eq.s32.totalorder %v432, %v1060
      %vm1069 = vcmp.eq.s32.totalorder %v432, %v1063
      %vm1070 = vcmp.eq.s32.totalorder %v432, %v1066
      %v1071 = vsel %vm1067, 1, 0
      %v1072 = vsel %vm1068, 1, 0
      %v1073 = vsel %vm1069, 1, 0
      %v1074 = vsel %vm1070, 1, 0
      %v1075 = vcvt.s32.f32 %v1071
      %v1076 = vcvt.s32.f32 %v1072
      %v1077 = vcvt.s32.f32 %v1073
      %v1078 = vcvt.s32.f32 %v1074
      %v1080 = vsel %vm457, %v1075, 0
      %v1083 = vsel %vm457, %v1076, 0
      %v1086 = vsel %vm457, %v1077, 0
      %v1089 = vsel %vm457, %v1078, 0
      %1091 = vmatprep.subr.mxu0 0.0
      %1092 = vmatpush1.msra.mxu0 0.0
      %1093 = vmatprep.subr.mxu0 0.0
      %1094 = vmatpush1.msra.mxu0 0.0
      %1095 = vmatprep.subr.mxu0 0.0
      %1096 = vmatpush1.msra.mxu0 0.0
      %1097 = vmatprep.subr.mxu0 0.0
      %1098 = vmatpush1.msra.mxu0 0.0
      %1099 = vmatprep.subr.mxu0 0.0
      %1100 = vmatpush1.msra.mxu0 0.0
      %1101 = vmatprep.subr.mxu0 0.0
      %1102 = vmatpush1.msra.mxu0 0.0
      %1103 = vmatprep.subr.mxu0 0.0
      %1104 = vmatpush1.msra.mxu0 0.0
      %1105 = vmatprep.subr.mxu0 0.0
      %1106 = vmatpush1.msra.mxu0 0.0
      %1107 = vmatprep.subr.mxu0 0.0
      %1108 = vmatpush1.msra.mxu0 0.0
      %1109 = vmatprep.subr.mxu0 0.0
      %1110 = vmatpush1.msra.mxu0 0.0
      %1111 = vmatprep.subr.mxu0 0.0
      %1112 = vmatpush1.msra.mxu0 0.0
      %1113 = vmatprep.subr.mxu0 0.0
      %1114 = vmatpush1.msra.mxu0 0.0
      %1115 = vmatprep.subr.mxu0 0.0
      %1116 = vmatpush1.msra.mxu0 %v420
      %1117 = vmatprep.subr.mxu0 0.0
      %1118 = vmatpush1.msra.mxu0 %v419
      %1119 = vmatprep.subr.mxu0 0.0
      %1120 = vmatpush1.msra.mxu0 %v418
      %1121 = vmatprep.subr.mxu0 0.0
      %1122 = vmatpush1.msra.mxu0 %v417
      %1123 = vmatprep.subr.mxu0 0.0
      %1124 = vmatpush2.msra.mxu0 0.0
      %1125 = vmatprep.subr.mxu0 0.0
      %1126 = vmatpush2.msra.mxu0 0.0
      %1127 = vmatprep.subr.mxu0 0.0
      %1128 = vmatpush2.msra.mxu0 0.0
      %1129 = vmatprep.subr.mxu0 0.0
      %1130 = vmatpush2.msra.mxu0 0.0
      %1131 = vmatprep.subr.mxu0 0.0
      %1132 = vmatpush2.msra.mxu0 0.0
      %1133 = vmatprep.subr.mxu0 0.0
      %1134 = vmatpush2.msra.mxu0 0.0
      %1135 = vmatprep.subr.mxu0 0.0
      %1136 = vmatpush2.msra.mxu0 0.0
      %1137 = vmatprep.subr.mxu0 0.0
      %1138 = vmatpush2.msra.mxu0 0.0
      %1139 = vmatprep.subr.mxu0 0.0
      %1140 = vmatpush2.msra.mxu0 0.0
      %1141 = vmatprep.subr.mxu0 0.0
      %1142 = vmatpush2.msra.mxu0 0.0
      %1143 = vmatprep.subr.mxu0 0.0
      %1144 = vmatpush2.msra.mxu0 0.0
      %1145 = vmatprep.subr.mxu0 0.0
      %1146 = vmatpush2.msra.mxu0 0.0
      %1147 = vmatprep.subr.mxu0 0.0
      %1148 = vmatpush2.msra.mxu0 0.0
      %1149 = vmatprep.subr.mxu0 0.0
      %1150 = vmatpush2.msra.mxu0 0.0
      %1151 = vmatprep.subr.mxu0 0.0
      %1152 = vmatpush2.msra.mxu0 0.0
      %1153 = vmatprep.subr.mxu0 0.0
      %1154 = vmatpush2.msra.mxu0 0.0
      %1155 = vmatprep.mubr.f32.mxu0 0.0
      %1156 = vmatmul.mubr.f32.gmra.mxu0 %v1080
      %v1157 = vpop.f32.mrf.mxu0
      %v1158 = vadd.f32 0.0, %v1157
      %v1159 = vpop.f32.mrf.mxu0
      %1160 = vmatprep.mubr.f32.mxu0 0.0
      %1161 = vmatmul.mubr.f32.gmra.mxu0 %v1083
      %v1162 = vpop.f32.mrf.mxu0
      %v1163 = vadd.f32 0.0, %v1162
      %v1164 = vpop.f32.mrf.mxu0
      %1165 = vmatprep.mubr.f32.mxu0 0.0
      %1166 = vmatmul.mubr.f32.gmra.mxu0 %v1086
      %v1167 = vpop.f32.mrf.mxu0
      %v1168 = vadd.f32 0.0, %v1167
      %v1169 = vpop.f32.mrf.mxu0
      %1170 = vmatprep.mubr.f32.mxu0 0.0
      %1171 = vmatmul.mubr.f32.gmra.mxu0 %v1089
      %v1172 = vpop.f32.mrf.mxu0
      %v1173 = vadd.f32 0.0, %v1172
      %v1174 = vpop.f32.mrf.mxu0
      %1175 = vdwg.mxu0
      %v1176 = vmax.f32 %v1051, %v1158
      %v1177 = vmax.f32 %v1052, %v1163
      %v1178 = vmax.f32 %v1053, %v1168
      %v1179 = vmax.f32 %v1054, %v1173
      %1180 = vset.pattern.permute.xlu0 6
      %1181 = vperm.xlu0 %1180, %v421
      %v1182 = vpop.permute.xlu0 %1181
      %1183 = vset.pattern.permute.xlu0 6
      %1184 = vperm.xlu0 %1183, %v422
      %v1185 = vpop.permute.xlu0 %1184
      %1186 = vset.pattern.permute.xlu0 6
      %1187 = vperm.xlu0 %1186, %v423
      %v1188 = vpop.permute.xlu0 %1187
      %1189 = vset.pattern.permute.xlu0 6
      %1190 = vperm.xlu0 %1189, %v424
      %v1191 = vpop.permute.xlu0 %1190
      %vm1192 = vcmp.eq.s32.totalorder %v432, %v1182
      %vm1193 = vcmp.eq.s32.totalorder %v432, %v1185
      %vm1194 = vcmp.eq.s32.totalorder %v432, %v1188
      %vm1195 = vcmp.eq.s32.totalorder %v432, %v1191
      %v1196 = vsel %vm1192, 1, 0
      %v1197 = vsel %vm1193, 1, 0
      %v1198 = vsel %vm1194, 1, 0
      %v1199 = vsel %vm1195, 1, 0
      %v1200 = vcvt.s32.f32 %v1196
      %v1201 = vcvt.s32.f32 %v1197
      %v1202 = vcvt.s32.f32 %v1198
      %v1203 = vcvt.s32.f32 %v1199
      %v1205 = vsel %vm457, %v1200, 0
      %v1208 = vsel %vm457, %v1201, 0
      %v1211 = vsel %vm457, %v1202, 0
      %v1214 = vsel %vm457, %v1203, 0
      %1216 = vmatprep.subr.mxu0 0.0
      %1217 = vmatpush1.msra.mxu0 0.0
      %1218 = vmatprep.subr.mxu0 0.0
      %1219 = vmatpush1.msra.mxu0 0.0
      %1220 = vmatprep.subr.mxu0 0.0
      %1221 = vmatpush1.msra.mxu0 0.0
      %1222 = vmatprep.subr.mxu0 0.0
      %1223 = vmatpush1.msra.mxu0 0.0
      %1224 = vmatprep.subr.mxu0 0.0
      %1225 = vmatpush1.msra.mxu0 0.0
      %1226 = vmatprep.subr.mxu0 0.0
      %1227 = vmatpush1.msra.mxu0 0.0
      %1228 = vmatprep.subr.mxu0 0.0
      %1229 = vmatpush1.msra.mxu0 0.0
      %1230 = vmatprep.subr.mxu0 0.0
      %1231 = vmatpush1.msra.mxu0 0.0
      %1232 = vmatprep.subr.mxu0 0.0
      %1233 = vmatpush1.msra.mxu0 0.0
      %1234 = vmatprep.subr.mxu0 0.0
      %1235 = vmatpush1.msra.mxu0 0.0
      %1236 = vmatprep.subr.mxu0 0.0
      %1237 = vmatpush1.msra.mxu0 0.0
      %1238 = vmatprep.subr.mxu0 0.0
      %1239 = vmatpush1.msra.mxu0 0.0
      %1240 = vmatprep.subr.mxu0 0.0
      %1241 = vmatpush1.msra.mxu0 %v420
      %1242 = vmatprep.subr.mxu0 0.0
      %1243 = vmatpush1.msra.mxu0 %v419
      %1244 = vmatprep.subr.mxu0 0.0
      %1245 = vmatpush1.msra.mxu0 %v418
      %1246 = vmatprep.subr.mxu0 0.0
      %1247 = vmatpush1.msra.mxu0 %v417
      %1248 = vmatprep.subr.mxu0 0.0
      %1249 = vmatpush2.msra.mxu0 0.0
      %1250 = vmatprep.subr.mxu0 0.0
      %1251 = vmatpush2.msra.mxu0 0.0
      %1252 = vmatprep.subr.mxu0 0.0
      %1253 = vmatpush2.msra.mxu0 0.0
      %1254 = vmatprep.subr.mxu0 0.0
      %1255 = vmatpush2.msra.mxu0 0.0
      %1256 = vmatprep.subr.mxu0 0.0
      %1257 = vmatpush2.msra.mxu0 0.0
      %1258 = vmatprep.subr.mxu0 0.0
      %1259 = vmatpush2.msra.mxu0 0.0
      %1260 = vmatprep.subr.mxu0 0.0
      %1261 = vmatpush2.msra.mxu0 0.0
      %1262 = vmatprep.subr.mxu0 0.0
      %1263 = vmatpush2.msra.mxu0 0.0
      %1264 = vmatprep.subr.mxu0 0.0
      %1265 = vmatpush2.msra.mxu0 0.0
      %1266 = vmatprep.subr.mxu0 0.0
      %1267 = vmatpush2.msra.mxu0 0.0
      %1268 = vmatprep.subr.mxu0 0.0
      %1269 = vmatpush2.msra.mxu0 0.0
      %1270 = vmatprep.subr.mxu0 0.0
      %1271 = vmatpush2.msra.mxu0 0.0
      %1272 = vmatprep.subr.mxu0 0.0
      %1273 = vmatpush2.msra.mxu0 0.0
      %1274 = vmatprep.subr.mxu0 0.0
      %1275 = vmatpush2.msra.mxu0 0.0
      %1276 = vmatprep.subr.mxu0 0.0
      %1277 = vmatpush2.msra.mxu0 0.0
      %1278 = vmatprep.subr.mxu0 0.0
      %1279 = vmatpush2.msra.mxu0 0.0
      %1280 = vmatprep.mubr.f32.mxu0 0.0
      %1281 = vmatmul.mubr.f32.gmra.mxu0 %v1205
      %v1282 = vpop.f32.mrf.mxu0
      %v1283 = vadd.f32 0.0, %v1282
      %v1284 = vpop.f32.mrf.mxu0
      %1285 = vmatprep.mubr.f32.mxu0 0.0
      %1286 = vmatmul.mubr.f32.gmra.mxu0 %v1208
      %v1287 = vpop.f32.mrf.mxu0
      %v1288 = vadd.f32 0.0, %v1287
      %v1289 = vpop.f32.mrf.mxu0
      %1290 = vmatprep.mubr.f32.mxu0 0.0
      %1291 = vmatmul.mubr.f32.gmra.mxu0 %v1211
      %v1292 = vpop.f32.mrf.mxu0
      %v1293 = vadd.f32 0.0, %v1292
      %v1294 = vpop.f32.mrf.mxu0
      %1295 = vmatprep.mubr.f32.mxu0 0.0
      %1296 = vmatmul.mubr.f32.gmra.mxu0 %v1214
      %v1297 = vpop.f32.mrf.mxu0
      %v1298 = vadd.f32 0.0, %v1297
      %v1299 = vpop.f32.mrf.mxu0
      %1300 = vdwg.mxu0
      %v1301 = vmax.f32 %v1176, %v1283
      %v1302 = vmax.f32 %v1177, %v1288
      %v1303 = vmax.f32 %v1178, %v1293
      %v1304 = vmax.f32 %v1179, %v1298
      %1305 = vset.pattern.permute.xlu0 7
      %1306 = vperm.xlu0 %1305, %v421
      %v1307 = vpop.permute.xlu0 %1306
      %1308 = vset.pattern.permute.xlu0 7
      %1309 = vperm.xlu0 %1308, %v422
      %v1310 = vpop.permute.xlu0 %1309
      %1311 = vset.pattern.permute.xlu0 7
      %1312 = vperm.xlu0 %1311, %v423
      %v1313 = vpop.permute.xlu0 %1312
      %1314 = vset.pattern.permute.xlu0 7
      %1315 = vperm.xlu0 %1314, %v424
      %v1316 = vpop.permute.xlu0 %1315
      %vm1317 = vcmp.eq.s32.totalorder %v432, %v1307
      %vm1318 = vcmp.eq.s32.totalorder %v432, %v1310
      %vm1319 = vcmp.eq.s32.totalorder %v432, %v1313
      %vm1320 = vcmp.eq.s32.totalorder %v432, %v1316
      %v1321 = vsel %vm1317, 1, 0
      %v1322 = vsel %vm1318, 1, 0
      %v1323 = vsel %vm1319, 1, 0
      %v1324 = vsel %vm1320, 1, 0
      %v1325 = vcvt.s32.f32 %v1321
      %v1326 = vcvt.s32.f32 %v1322
      %v1327 = vcvt.s32.f32 %v1323
      %v1328 = vcvt.s32.f32 %v1324
      %v1330 = vsel %vm457, %v1325, 0
      %v1333 = vsel %vm457, %v1326, 0
      %v1336 = vsel %vm457, %v1327, 0
      %v1339 = vsel %vm457, %v1328, 0
      %1341 = vmatprep.subr.mxu0 0.0
      %1342 = vmatpush1.msra.mxu0 0.0
      %1343 = vmatprep.subr.mxu0 0.0
      %1344 = vmatpush1.msra.mxu0 0.0
      %1345 = vmatprep.subr.mxu0 0.0
      %1346 = vmatpush1.msra.mxu0 0.0
      %1347 = vmatprep.subr.mxu0 0.0
      %1348 = vmatpush1.msra.mxu0 0.0
      %1349 = vmatprep.subr.mxu0 0.0
      %1350 = vmatpush1.msra.mxu0 0.0
      %1351 = vmatprep.subr.mxu0 0.0
      %1352 = vmatpush1.msra.mxu0 0.0
      %1353 = vmatprep.subr.mxu0 0.0
      %1354 = vmatpush1.msra.mxu0 0.0
      %1355 = vmatprep.subr.mxu0 0.0
      %1356 = vmatpush1.msra.mxu0 0.0
      %1357 = vmatprep.subr.mxu0 0.0
      %1358 = vmatpush1.msra.mxu0 0.0
      %1359 = vmatprep.subr.mxu0 0.0
      %1360 = vmatpush1.msra.mxu0 0.0
      %1361 = vmatprep.subr.mxu0 0.0
      %1362 = vmatpush1.msra.mxu0 0.0
      %1363 = vmatprep.subr.mxu0 0.0
      %1364 = vmatpush1.msra.mxu0 0.0
      %1365 = vmatprep.subr.mxu0 0.0
      %1366 = vmatpush1.msra.mxu0 %v420
      %1367 = vmatprep.subr.mxu0 0.0
      %1368 = vmatpush1.msra.mxu0 %v419
      %1369 = vmatprep.subr.mxu0 0.0
      %1370 = vmatpush1.msra.mxu0 %v418
      %1371 = vmatprep.subr.mxu0 0.0
      %1372 = vmatpush1.msra.mxu0 %v417
      %1373 = vmatprep.subr.mxu0 0.0
      %1374 = vmatpush2.msra.mxu0 0.0
      %1375 = vmatprep.subr.mxu0 0.0
      %1376 = vmatpush2.msra.mxu0 0.0
      %1377 = vmatprep.subr.mxu0 0.0
      %1378 = vmatpush2.msra.mxu0 0.0
      %1379 = vmatprep.subr.mxu0 0.0
      %1380 = vmatpush2.msra.mxu0 0.0
      %1381 = vmatprep.subr.mxu0 0.0
      %1382 = vmatpush2.msra.mxu0 0.0
      %1383 = vmatprep.subr.mxu0 0.0
      %1384 = vmatpush2.msra.mxu0 0.0
      %1385 = vmatprep.subr.mxu0 0.0
      %1386 = vmatpush2.msra.mxu0 0.0
      %1387 = vmatprep.subr.mxu0 0.0
      %1388 = vmatpush2.msra.mxu0 0.0
      %1389 = vmatprep.subr.mxu0 0.0
      %1390 = vmatpush2.msra.mxu0 0.0
      %1391 = vmatprep.subr.mxu0 0.0
      %1392 = vmatpush2.msra.mxu0 0.0
      %1393 = vmatprep.subr.mxu0 0.0
      %1394 = vmatpush2.msra.mxu0 0.0
      %1395 = vmatprep.subr.mxu0 0.0
      %1396 = vmatpush2.msra.mxu0 0.0
      %1397 = vmatprep.subr.mxu0 0.0
      %1398 = vmatpush2.msra.mxu0 0.0
      %1399 = vmatprep.subr.mxu0 0.0
      %1400 = vmatpush2.msra.mxu0 0.0
      %1401 = vmatprep.subr.mxu0 0.0
      %1402 = vmatpush2.msra.mxu0 0.0
      %1403 = vmatprep.subr.mxu0 0.0
      %1404 = vmatpush2.msra.mxu0 0.0
      %1405 = vmatprep.mubr.f32.mxu0 0.0
      %1406 = vmatmul.mubr.f32.gmra.mxu0 %v1330
      %v1407 = vpop.f32.mrf.mxu0
      %v1408 = vadd.f32 0.0, %v1407
      %v1409 = vpop.f32.mrf.mxu0
      %1410 = vmatprep.mubr.f32.mxu0 0.0
      %1411 = vmatmul.mubr.f32.gmra.mxu0 %v1333
      %v1412 = vpop.f32.mrf.mxu0
      %v1413 = vadd.f32 0.0, %v1412
      %v1414 = vpop.f32.mrf.mxu0
      %1415 = vmatprep.mubr.f32.mxu0 0.0
      %1416 = vmatmul.mubr.f32.gmra.mxu0 %v1336
      %v1417 = vpop.f32.mrf.mxu0
      %v1418 = vadd.f32 0.0, %v1417
      %v1419 = vpop.f32.mrf.mxu0
      %1420 = vmatprep.mubr.f32.mxu0 0.0
      %1421 = vmatmul.mubr.f32.gmra.mxu0 %v1339
      %v1422 = vpop.f32.mrf.mxu0
      %v1423 = vadd.f32 0.0, %v1422
      %v1424 = vpop.f32.mrf.mxu0
      %1425 = vdwg.mxu0
      %v1426 = vmax.f32 %v1301, %v1408
      %v1427 = vmax.f32 %v1302, %v1413
      %v1428 = vmax.f32 %v1303, %v1418
      %v1429 = vmax.f32 %v1304, %v1423
      %v1430 = vsub.f32 %v1426, %v427
      %v1431 = vsub.f32 %v1427, %v428
      %v1432 = vsub.f32 %v1428, %v429
      %v1433 = vsub.f32 %v1429, %v430
      %v1434 = vpack.c.bf16 %v1431, %v1430
      %v1435 = vpack.c.bf16 %v1433, %v1432
      %v1438 = vunpack.c.l.b16 %v1434
      %v1439 = vunpack.c.h.b16 %v1434
      %v1440 = vunpack.c.l.b16 %v1435
      %v1441 = vunpack.c.h.b16 %v1435
      %v1442 = vpack.c.b16 %v1438, %v1438
      %v1443 = vpack.c.b16 %v1439, %v1439
      %v1444 = vpack.c.b16 %v1440, %v1440
      %v1445 = vpack.c.b16 %v1441, %v1441
      %vm1450 = vcmask 257024
      %1451 = vst.msk [vmem:[%s293] sm:$0xf] %vm1450, %v1442
      %1452 = vst.msk [vmem:[%s293 + $0x4] sm:$0xf] %vm1450, %v1443
      %1453 = vst.msk [vmem:[%s293 + $0x8] sm:$0xf] %vm1450, %v1444
      %1454 = vst.msk [vmem:[%s293 + $0xc] sm:$0xf] %vm1450, %v1445
      %v1455 = vunpack.c.l.bf16 %v1434
      %v1456 = vunpack.c.h.bf16 %v1434
      %v1457 = vunpack.c.l.bf16 %v1435
      %v1458 = vunpack.c.h.bf16 %v1435
      %v1459 = vld [vmem:[%s297] sm:$0x1]
      %v1460 = vsel %vm457, %v1455, 0.0
      %v1461 = vsel %vm457, %v1456, 0.0
      %v1462 = vadd.f32 %v1460, %v1461
      %v1463 = vsel %vm457, %v1457, 0.0
      %v1464 = vadd.f32 %v1462, %v1463
      %v1465 = vsel %vm457, %v1458, 0.0
      %v1466 = vadd.f32 %v1464, %v1465
      %v1467 = vrot.slane %v1466, 4
      %v1468 = vadd.f32 %v1466, %v1467
      %v1469 = vrot.slane %v1468, 2
      %v1470 = vadd.f32 %v1468, %v1469
      %v1471 = vrot.slane %v1470, 1
      %v1472 = vadd.f32 %v1470, %v1471
      %v1473 = vadd.f32 %v1459, %v1472
      %vm1474 = vcmask 253952
      %1475 = vst.msk [vmem:[%s297] sm:$0x1] %vm1474, %v1473
      %v1476 = vld [vmem:[%s300] sm:$0x1]
      %v1477 = vmul.f32 %v1455, %v1455
      %v1478 = vmul.f32 %v1456, %v1456
      %v1479 = vmul.f32 %v1457, %v1457
      %v1480 = vmul.f32 %v1458, %v1458
      %v1481 = vsel %vm457, %v1477, 0.0
      %v1482 = vsel %vm457, %v1478, 0.0
      %v1483 = vadd.f32 %v1481, %v1482
      %v1484 = vsel %vm457, %v1479, 0.0
      %v1485 = vadd.f32 %v1483, %v1484
      %v1486 = vsel %vm457, %v1480, 0.0
      %v1487 = vadd.f32 %v1485, %v1486
      %v1488 = vrot.slane %v1487, 4
      %v1489 = vadd.f32 %v1487, %v1488
      %v1490 = vrot.slane %v1489, 2
      %v1491 = vadd.f32 %v1489, %v1490
      %v1492 = vrot.slane %v1491, 1
      %v1493 = vadd.f32 %v1491, %v1492
      %v1494 = vadd.f32 %v1476, %v1493
      %1495 = vst.msk [vmem:[%s300] sm:$0x1] %vm1474, %v1494
      %s1496 = smul.u32 4, %s22
      %p1497 = scmp.lt.s32.totalorder %s21, 1
      %s1498 = scalar_select %p1497, %s21, 1
      %p1499 = scmp.lt.s32.totalorder %s1496, 3
      %s1500 = scalar_select %p1499, %s1496, 3
      %s1501 = smul.addr %s1498, 4
      %s1502 = sadd.s32 %s1500, %s1501
      %s1503 = smul.addr %s1502, 4
      %s1504 = scalar_lea.vmem %s3, %s1503
      %p1505 = scmp.lt.s32.totalorder %s21, 1
      %s1506 = scalar_select %p1505, %s21, 1
      %s1507 = scalar_lea.vmem %s4, %s1506
      %p1508 = scmp.lt.s32.totalorder %s21, 1
      %s1509 = scalar_select %p1508, %s21, 1
      %s1510 = scalar_lea.vmem %s5, %s1509
      // Predicated region
      $region37: #{vfr_forward.2} parent=31 // pred_check
        %p1511 = pneg %p124
      $region38: #{vfr_forward.2} parent=31 // pred_check_branch
        %1513 = sbr.rel (%p1511) target = $region40
      $region39: #{vfr_forward.2} parent=31 // pred_region
        %s1514 = smul.u32 4, %s22
      $region40: #{vfr_forward.2} parent=31 // pred_fallthru
        _
      // Predicated region
      $region41: #{vfr_forward.2} parent=31 // pred_check
        %p1515 = pneg %p150
      $region42: #{vfr_forward.2} parent=31 // pred_check_branch
        %1517 = sbr.rel (%p1515) target = $region44
      $region43: #{vfr_forward.2} parent=31 // pred_region
        _
      $region44: #{vfr_forward.2} parent=31 // pred_fallthru
        _
      // Predicated region
      $region45: #{vfr_forward.2} parent=31 // pred_check
        %p1518 = pneg %p176
      $region46: #{vfr_forward.2} parent=31 // pred_check_branch
        %1520 = sbr.rel (%p1518) target = $region48
      $region47: #{vfr_forward.2} parent=31 // pred_region
        _
      $region48: #{vfr_forward.2} parent=31 // pred_fallthru
        _
    $region32: #{vfr_forward.2} parent=5 // pred_fallthru
      _
    %p1521 = scmp.le.s32.totalorder 2, %s12
    // Predicated region
    $region49: #{vfr_forward.2} parent=5 // pred_check
      %p1522 = pneg %p1521
    $region50: #{vfr_forward.2} parent=5 // pred_check_branch
      %1524 = sbr.rel (%p1522) target = $region52
    $region51: #{vfr_forward.2} parent=5 // pred_region
      %s1525 = ssub.s32 %s12, 2
      // Predicated region
      $region53: #{vfr_forward.2} parent=51 // pred_check
        %p1526 = pneg %p130
      $region54: #{vfr_forward.2} parent=51 // pred_check_branch
        %1528 = sbr.rel (%p1526) target = $region56
      $region55: #{vfr_forward.2} parent=51 // pred_region
        %s1529 = smul.u32 4, %s24
        %p1530 = scmp.lt.s32.totalorder %s23, 1
        %s1531 = scalar_select %p1530, %s23, 1
        %p1532 = scmp.lt.s32.totalorder %s1529, 3
        %s1533 = scalar_select %p1532, %s1529, 3
        %s1534 = smul.addr %s1531, 4
        %s1535 = sadd.s32 %s1533, %s1534
        %s1536 = smul.addr %s1535, 4
        %s1537 = scalar_lea.vmem %s3, %s1536
      $region56: #{vfr_forward.2} parent=51 // pred_fallthru
        _
      // Predicated region
      $region57: #{vfr_forward.2} parent=51 // pred_check
        %p1538 = pneg %p156
      $region58: #{vfr_forward.2} parent=51 // pred_check_branch
        %1540 = sbr.rel (%p1538) target = $region60
      $region59: #{vfr_forward.2} parent=51 // pred_region
        %p1541 = scmp.lt.s32.totalorder %s23, 1
        %s1542 = scalar_select %p1541, %s23, 1
        %s1543 = scalar_lea.vmem %s4, %s1542
      $region60: #{vfr_forward.2} parent=51 // pred_fallthru
        _
      // Predicated region
      $region61: #{vfr_forward.2} parent=51 // pred_check
        %p1544 = pneg %p182
      $region62: #{vfr_forward.2} parent=51 // pred_check_branch
        %1546 = sbr.rel (%p1544) target = $region64
      $region63: #{vfr_forward.2} parent=51 // pred_region
        %p1547 = scmp.lt.s32.totalorder %s23, 1
        %s1548 = scalar_select %p1547, %s23, 1
        %s1549 = scalar_lea.vmem %s5, %s1548
      $region64: #{vfr_forward.2} parent=51 // pred_fallthru
        _
    $region52: #{vfr_forward.2} parent=5 // pred_fallthru
      _
  $region6: #{vfr_forward.2} parent=0 // loop_footer
    %s16 = sadd.s32 1, %s12
  $region7: #{vfr_forward.2} parent=0 // loop_footer_branch
    %11 = sbr.rel target = $region3
  $region8: #{vfr_forward.2} parent=0 // loop_exit
    _

</llo_original>
